<compile_context>
chip_gen: v6e
topology: v6e:2x2x1
jax: 0.10.0
libtpu: 0.0.40
codegen_flags: <defaults>
</compile_context>

<pallas_src>
import functools
import math

import jax
import jax.numpy as jnp
from jax.experimental import pallas as pl
from jax.experimental.pallas import tpu as pltpu


# ----------------------------------------------------------------------------
# Helpers
# ----------------------------------------------------------------------------
def _round_up(x, m):
    return ((x + m - 1) // m) * m


def _tile_and_pad(dim, pref, base):
    """Pick a tile size and the padded dim (padded % tile == 0)."""
    if dim >= pref:
        tile = pref
    else:
        tile = _round_up(dim, base)
    return tile, _round_up(dim, tile)


def _pad2d(a, rows, cols):
    r, c = a.shape
    if r == rows and c == cols:
        return a
    return jnp.pad(a, ((0, rows - r), (0, cols - c)))


# ----------------------------------------------------------------------------
# Pallas kernels
# ----------------------------------------------------------------------------
def _matmul_kernel(a_ref, b_ref, o_ref):
    """Tiled matmul; grid = (M/tm, N/tn, K/tk), K (reduction) last.

    The output BlockSpec returns the same (i, j) block for every k, so the
    f32 output tile stays resident in VMEM across the reduction axis and we
    accumulate into it directly (no scratch accumulator).
    """
    @pl.when(pl.program_id(2) == 0)
    def _init():
        o_ref[...] = jnp.zeros_like(o_ref)

    o_ref[...] += jnp.dot(a_ref[...], b_ref[...],
                          preferred_element_type=jnp.float32)


def _matmul_bias_kernel(a_ref, b_ref, bias_ref, o_ref):
    """Same as _matmul_kernel, adds a (1, tn)-broadcast bias on finalize."""
    @pl.when(pl.program_id(2) == 0)
    def _init():
        o_ref[...] = jnp.zeros_like(o_ref)

    o_ref[...] += jnp.dot(a_ref[...], b_ref[...],
                          preferred_element_type=jnp.float32)

    @pl.when(pl.program_id(2) == pl.num_programs(2) - 1)
    def _bias():
        o_ref[...] += bias_ref[...]


def pallas_matmul(a, b, bias=None, *, tm_pref=256, tn_pref=256, tk_pref=512):
    """C = A @ B (+ bias). A:(M,K) B:(K,N) bias:(N,) -> (M,N) float32.

    Arbitrary shapes are supported via zero-padding to tile-aligned sizes
    (zeros contribute nothing to the products); the result is sliced back.
    """
    M, K = a.shape
    K2, N = b.shape
    assert K == K2, f"inner dims mismatch: {K} vs {K2}"

    tm, Mp = _tile_and_pad(M, tm_pref, 8)     # sublane-aligned rows
    tn, Np = _tile_and_pad(N, tn_pref, 128)   # lane-dense output columns
    tk, Kp = _tile_and_pad(K, tk_pref, 128)   # lane-aligned reduction

    a_p = _pad2d(a.astype(jnp.float32), Mp, Kp)
    b_p = _pad2d(b.astype(jnp.float32), Kp, Np)

    grid = (Mp // tm, Np // tn, Kp // tk)
    a_spec = pl.BlockSpec((tm, tk), lambda i, j, k: (i, k))
    b_spec = pl.BlockSpec((tk, tn), lambda i, j, k: (k, j))
    o_spec = pl.BlockSpec((tm, tn), lambda i, j, k: (i, j))
    cparams = pltpu.CompilerParams(
        dimension_semantics=("parallel", "parallel", "arbitrary"))

    if bias is None:
        out = pl.pallas_call(
            _matmul_kernel,
            out_shape=jax.ShapeDtypeStruct((Mp, Np), jnp.float32),
            grid_spec=pltpu.PrefetchScalarGridSpec(
                num_scalar_prefetch=0, grid=grid,
                in_specs=[a_spec, b_spec], out_specs=o_spec),
            compiler_params=cparams,
        )(a_p, b_p)
    else:
        bias_p = _pad2d(bias.reshape(1, N).astype(jnp.float32), 1, Np)
        bias_spec = pl.BlockSpec((1, tn), lambda i, j, k: (0, j))
        out = pl.pallas_call(
            _matmul_bias_kernel,
            out_shape=jax.ShapeDtypeStruct((Mp, Np), jnp.float32),
            grid_spec=pltpu.PrefetchScalarGridSpec(
                num_scalar_prefetch=0, grid=grid,
                in_specs=[a_spec, b_spec, bias_spec], out_specs=o_spec),
            compiler_params=cparams,
        )(a_p, b_p, bias_p)

    if (Mp, Np) != (M, N):
        out = out[:M, :N]
    return out


# ----------------------------------------------------------------------------
# HGCN forward (Pallas)
# ----------------------------------------------------------------------------
@functools.partial(jax.jit, static_argnames=("use_bias",))
def hgcn_forward(g1, g2, x, weight, p, bias, use_bias=True):
    # Right-to-left association of  g1 @ W @ g2 @ x @ p  (+ bias):
    #   xp = x  @ p        (M,  out)
    #   t  = g2 @ xp       (Nw, out)
    #   t  = W  @ t        (Nw, out)
    #   g  = g1 @ t + b    (M,  out)
    # Same math as the module; intermediates are only `output_dim` wide.
    xp = pallas_matmul(x, p)
    t = pallas_matmul(g2, xp)
    t = pallas_matmul(weight, t)
    if use_bias:
        return pallas_matmul(g1, t, bias)   # bias fused into final matmul
    return pallas_matmul(g1, t)


# ----------------------------------------------------------------------------
# Parameter init (deterministic, mirrors reset_parameters)
# ----------------------------------------------------------------------------
def init_hgcn_params(key, n_weight, input_dim, output_dim, use_bias=True):
    stdv = 1.0 / math.sqrt(output_dim)
    k_p, k_b = jax.random.split(key)
    weight = jnp.eye(n_weight, dtype=jnp.float32)        # torch.diag(ones(Nw))
    p = jax.random.uniform(k_p, (input_dim, output_dim),
                           minval=-stdv, maxval=stdv, dtype=jnp.float32)
    bias = (jax.random.uniform(k_b, (output_dim,),
                               minval=-stdv, maxval=stdv, dtype=jnp.float32)
            if use_bias else None)
    return weight, p, bias


if __name__ == "__main__":
    # Small, deliberately *non*-aligned shapes (none divisible by 128, M not
    # divisible by 8) to exercise the padding path that the module's
    # hard-coded Nw = 4900 requires.
    M = 100
    NW = 250
    INPUT_DIM = 48
    OUTPUT_DIM = 32

    key = jax.random.PRNGKey(0)
    k1, k2, k3, kparam = jax.random.split(key, 4)

    g1 = jax.random.normal(k1, (M, NW), dtype=jnp.float32)
    g2 = jax.random.normal(k2, (NW, M), dtype=jnp.float32)
    x = jax.random.normal(k3, (M, INPUT_DIM), dtype=jnp.float32)

    weight, p, bias = init_hgcn_params(kparam, NW, INPUT_DIM, OUTPUT_DIM,
                                       use_bias=True)

    out = hgcn_forward(g1, g2, x, weight, p, bias, use_bias=True)
    out = jax.block_until_ready(out)
    assert out.shape == (M, OUTPUT_DIM)

    # Reference 1: same (mathematically identical) association -> tight check
    # of the Pallas matmul chain itself.
    ref_rtl = g1 @ (weight @ (g2 @ (x @ p))) + bias
    assert jnp.allclose(out, ref_rtl, rtol=1e-3, atol=1e-2), \
        "mismatch vs right-to-left reference"

    # Reference 2: the module's literal left-to-right order; loose tolerance
    # only because f.p. summation order (and MXU precision mode) differs.
    ref_ltr = (((g1 @ weight) @ g2) @ x) @ p + bias
    assert jnp.allclose(out, ref_ltr, rtol=5e-2, atol=1.0), \
        "mismatch vs left-to-right reference"

    print("KERNEL_OK")
</pallas_src>

<mosaic_0001>
module attributes {stable_mosaic.version = 11 : i64} {
  func.func @_matmul_kernel(%arg0: i32, %arg1: i32, %arg2: i32, %arg3: memref<104x128xf32, #tpu.memory_space<vmem>>, %arg4: memref<128x128xf32, #tpu.memory_space<vmem>>, %arg5: memref<104x128xf32, #tpu.memory_space<vmem>>) attributes {dimension_semantics = [#tpu.dimension_semantics<parallel>, #tpu.dimension_semantics<parallel>, #tpu.dimension_semantics<arbitrary>], iteration_bounds = array<i64: 1, 1, 1>, scalar_prefetch = 0 : i64, scratch_operands = 0 : i64, tpu.core_type = #tpu.core_type<tc>, window_params = [{transform_indices = @transform_0, window_bounds = array<i64: 104, 128>}, {transform_indices = @transform_1, window_bounds = array<i64: 128, 128>}, {transform_indices = @transform_2, window_bounds = array<i64: 104, 128>}]} {
    %c0_i32 = arith.constant 0 : i32
    %0 = arith.cmpi eq, %arg2, %c0_i32 : i32
    %1 = arith.extui %0 : i1 to i32
    %c0_i32_0 = arith.constant 0 : i32
    %2 = arith.cmpi ne, %1, %c0_i32_0 : i32
    scf.if %2 {
      %cst_8 = arith.constant 0.000000e+00 : f32
      %9 = vector.broadcast %cst_8 : f32 to vector<104x128xf32>
      %c0_9 = arith.constant 0 : index
      %c0_10 = arith.constant 0 : index
      %10 = vector.load %arg5[%c0_9, %c0_10] : memref<104x128xf32, #tpu.memory_space<vmem>>, vector<104x128xf32>
      tpu.vector_store %arg5[%c0_9, %c0_10], %9 {strides = array<i32>} : memref<104x128xf32, #tpu.memory_space<vmem>>, vector<104x128xf32>,
    } else {
    }
    %c0 = arith.constant 0 : index
    %c0_1 = arith.constant 0 : index
    %3 = vector.load %arg5[%c0, %c0_1] : memref<104x128xf32, #tpu.memory_space<vmem>>, vector<104x128xf32>
    %c0_2 = arith.constant 0 : index
    %c0_3 = arith.constant 0 : index
    %4 = vector.load %arg3[%c0_2, %c0_3] : memref<104x128xf32, #tpu.memory_space<vmem>>, vector<104x128xf32>
    %c0_4 = arith.constant 0 : index
    %c0_5 = arith.constant 0 : index
    %5 = vector.load %arg4[%c0_4, %c0_5] : memref<128x128xf32, #tpu.memory_space<vmem>>, vector<128x128xf32>
    %cst = arith.constant dense<0.000000e+00> : vector<104x128xf32>
    %6 = tpu.matmul %4, %5, %cst {dimension_numbers = #tpu.dot_dimension_numbers<[1], [0], [0], [1], [0, 0, 1, 1], [], []>} : vector<104x128xf32>, vector<128x128xf32>, vector<104x128xf32> -> vector<104x128xf32>
    %7 = arith.addf %3, %6 : vector<104x128xf32>
    %c0_6 = arith.constant 0 : index
    %c0_7 = arith.constant 0 : index
    %8 = vector.load %arg5[%c0_6, %c0_7] : memref<104x128xf32, #tpu.memory_space<vmem>>, vector<104x128xf32>
    tpu.vector_store %arg5[%c0_6, %c0_7], %7 {strides = array<i32>} : memref<104x128xf32, #tpu.memory_space<vmem>>, vector<104x128xf32>,
    return
  }
  func.func @transform_0(%arg0: i32, %arg1: i32, %arg2: i32) -> (i32, i32) {
    %c0_i32 = arith.constant 0 : i32
    return %arg0, %arg2 : i32, i32
  }
  func.func @transform_1(%arg0: i32, %arg1: i32, %arg2: i32) -> (i32, i32) {
    %c0_i32 = arith.constant 0 : i32
    return %arg2, %arg1 : i32, i32
  }
  func.func @transform_2(%arg0: i32, %arg1: i32, %arg2: i32) -> (i32, i32) {
    %c0_i32 = arith.constant 0 : i32
    return %arg0, %arg1 : i32, i32
  }
}

module attributes {stable_mosaic.version = 11 : i64} {
  func.func @_matmul_kernel(%arg0: i32, %arg1: i32, %arg2: i32, %arg3: memref<256x128xf32, #tpu.memory_space<vmem>>, %arg4: memref<128x128xf32, #tpu.memory_space<vmem>>, %arg5: memref<256x128xf32, #tpu.memory_space<vmem>>) attributes {dimension_semantics = [#tpu.dimension_semantics<parallel>, #tpu.dimension_semantics<parallel>, #tpu.dimension_semantics<arbitrary>], iteration_bounds = array<i64: 1, 1, 1>, scalar_prefetch = 0 : i64, scratch_operands = 0 : i64, tpu.core_type = #tpu.core_type<tc>, window_params = [{transform_indices = @transform_0, window_bounds = array<i64: 256, 128>}, {transform_indices = @transform_1, window_bounds = array<i64: 128, 128>}, {transform_indices = @transform_2, window_bounds = array<i64: 256, 128>}]} {
    %c0_i32 = arith.constant 0 : i32
    %0 = arith.cmpi eq, %arg2, %c0_i32 : i32
    %1 = arith.extui %0 : i1 to i32
    %c0_i32_0 = arith.constant 0 : i32
    %2 = arith.cmpi ne, %1, %c0_i32_0 : i32
    scf.if %2 {
      %cst_8 = arith.constant 0.000000e+00 : f32
      %9 = vector.broadcast %cst_8 : f32 to vector<256x128xf32>
      %c0_9 = arith.constant 0 : index
      %c0_10 = arith.constant 0 : index
      %10 = vector.load %arg5[%c0_9, %c0_10] : memref<256x128xf32, #tpu.memory_space<vmem>>, vector<256x128xf32>
      tpu.vector_store %arg5[%c0_9, %c0_10], %9 {strides = array<i32>} : memref<256x128xf32, #tpu.memory_space<vmem>>, vector<256x128xf32>,
    } else {
    }
    %c0 = arith.constant 0 : index
    %c0_1 = arith.constant 0 : index
    %3 = vector.load %arg5[%c0, %c0_1] : memref<256x128xf32, #tpu.memory_space<vmem>>, vector<256x128xf32>
    %c0_2 = arith.constant 0 : index
    %c0_3 = arith.constant 0 : index
    %4 = vector.load %arg3[%c0_2, %c0_3] : memref<256x128xf32, #tpu.memory_space<vmem>>, vector<256x128xf32>
    %c0_4 = arith.constant 0 : index
    %c0_5 = arith.constant 0 : index
    %5 = vector.load %arg4[%c0_4, %c0_5] : memref<128x128xf32, #tpu.memory_space<vmem>>, vector<128x128xf32>
    %cst = arith.constant dense<0.000000e+00> : vector<256x128xf32>
    %6 = tpu.matmul %4, %5, %cst {dimension_numbers = #tpu.dot_dimension_numbers<[1], [0], [0], [1], [0, 0, 1, 1], [], []>} : vector<256x128xf32>, vector<128x128xf32>, vector<256x128xf32> -> vector<256x128xf32>
    %7 = arith.addf %3, %6 : vector<256x128xf32>
    %c0_6 = arith.constant 0 : index
    %c0_7 = arith.constant 0 : index
    %8 = vector.load %arg5[%c0_6, %c0_7] : memref<256x128xf32, #tpu.memory_space<vmem>>, vector<256x128xf32>
    tpu.vector_store %arg5[%c0_6, %c0_7], %7 {strides = array<i32>} : memref<256x128xf32, #tpu.memory_space<vmem>>, vector<256x128xf32>,
    return
  }
  func.func @transform_0(%arg0: i32, %arg1: i32, %arg2: i32) -> (i32, i32) {
    %c0_i32 = arith.constant 0 : i32
    return %arg0, %arg2 : i32, i32
  }
  func.func @transform_1(%arg0: i32, %arg1: i32, %arg2: i32) -> (i32, i32) {
    %c0_i32 = arith.constant 0 : i32
    return %arg2, %arg1 : i32, i32
  }
  func.func @transform_2(%arg0: i32, %arg1: i32, %arg2: i32) -> (i32, i32) {
    %c0_i32 = arith.constant 0 : i32
    return %arg0, %arg1 : i32, i32
  }
}

module attributes {stable_mosaic.version = 11 : i64} {
  func.func @_matmul_kernel(%arg0: i32, %arg1: i32, %arg2: i32, %arg3: memref<256x256xf32, #tpu.memory_space<vmem>>, %arg4: memref<256x128xf32, #tpu.memory_space<vmem>>, %arg5: memref<256x128xf32, #tpu.memory_space<vmem>>) attributes {dimension_semantics = [#tpu.dimension_semantics<parallel>, #tpu.dimension_semantics<parallel>, #tpu.dimension_semantics<arbitrary>], iteration_bounds = array<i64: 1, 1, 1>, scalar_prefetch = 0 : i64, scratch_operands = 0 : i64, tpu.core_type = #tpu.core_type<tc>, window_params = [{transform_indices = @transform_0, window_bounds = array<i64: 256, 256>}, {transform_indices = @transform_1, window_bounds = array<i64: 256, 128>}, {transform_indices = @transform_2, window_bounds = array<i64: 256, 128>}]} {
    %c0_i32 = arith.constant 0 : i32
    %0 = arith.cmpi eq, %arg2, %c0_i32 : i32
    %1 = arith.extui %0 : i1 to i32
    %c0_i32_0 = arith.constant 0 : i32
    %2 = arith.cmpi ne, %1, %c0_i32_0 : i32
    scf.if %2 {
      %cst_8 = arith.constant 0.000000e+00 : f32
      %9 = vector.broadcast %cst_8 : f32 to vector<256x128xf32>
      %c0_9 = arith.constant 0 : index
      %c0_10 = arith.constant 0 : index
      %10 = vector.load %arg5[%c0_9, %c0_10] : memref<256x128xf32, #tpu.memory_space<vmem>>, vector<256x128xf32>
      tpu.vector_store %arg5[%c0_9, %c0_10], %9 {strides = array<i32>} : memref<256x128xf32, #tpu.memory_space<vmem>>, vector<256x128xf32>,
    } else {
    }
    %c0 = arith.constant 0 : index
    %c0_1 = arith.constant 0 : index
    %3 = vector.load %arg5[%c0, %c0_1] : memref<256x128xf32, #tpu.memory_space<vmem>>, vector<256x128xf32>
    %c0_2 = arith.constant 0 : index
    %c0_3 = arith.constant 0 : index
    %4 = vector.load %arg3[%c0_2, %c0_3] : memref<256x256xf32, #tpu.memory_space<vmem>>, vector<256x256xf32>
    %c0_4 = arith.constant 0 : index
    %c0_5 = arith.constant 0 : index
    %5 = vector.load %arg4[%c0_4, %c0_5] : memref<256x128xf32, #tpu.memory_space<vmem>>, vector<256x128xf32>
    %cst = arith.constant dense<0.000000e+00> : vector<256x128xf32>
    %6 = tpu.matmul %4, %5, %cst {dimension_numbers = #tpu.dot_dimension_numbers<[1], [0], [0], [1], [0, 0, 1, 1], [], []>} : vector<256x256xf32>, vector<256x128xf32>, vector<256x128xf32> -> vector<256x128xf32>
    %7 = arith.addf %3, %6 : vector<256x128xf32>
    %c0_6 = arith.constant 0 : index
    %c0_7 = arith.constant 0 : index
    %8 = vector.load %arg5[%c0_6, %c0_7] : memref<256x128xf32, #tpu.memory_space<vmem>>, vector<256x128xf32>
    tpu.vector_store %arg5[%c0_6, %c0_7], %7 {strides = array<i32>} : memref<256x128xf32, #tpu.memory_space<vmem>>, vector<256x128xf32>,
    return
  }
  func.func @transform_0(%arg0: i32, %arg1: i32, %arg2: i32) -> (i32, i32) {
    %c0_i32 = arith.constant 0 : i32
    return %arg0, %arg2 : i32, i32
  }
  func.func @transform_1(%arg0: i32, %arg1: i32, %arg2: i32) -> (i32, i32) {
    %c0_i32 = arith.constant 0 : i32
    return %arg2, %arg1 : i32, i32
  }
  func.func @transform_2(%arg0: i32, %arg1: i32, %arg2: i32) -> (i32, i32) {
    %c0_i32 = arith.constant 0 : i32
    return %arg0, %arg1 : i32, i32
  }
}

module attributes {stable_mosaic.version = 11 : i64} {
  func.func @_matmul_bias_kernel(%arg0: i32, %arg1: i32, %arg2: i32, %arg3: memref<104x256xf32, #tpu.memory_space<vmem>>, %arg4: memref<256x128xf32, #tpu.memory_space<vmem>>, %arg5: memref<1x128xf32, #tpu.memory_space<vmem>>, %arg6: memref<104x128xf32, #tpu.memory_space<vmem>>) attributes {dimension_semantics = [#tpu.dimension_semantics<parallel>, #tpu.dimension_semantics<parallel>, #tpu.dimension_semantics<arbitrary>], iteration_bounds = array<i64: 1, 1, 1>, scalar_prefetch = 0 : i64, scratch_operands = 0 : i64, tpu.core_type = #tpu.core_type<tc>, window_params = [{transform_indices = @transform_0, window_bounds = array<i64: 104, 256>}, {transform_indices = @transform_1, window_bounds = array<i64: 256, 128>}, {transform_indices = @transform_2, window_bounds = array<i64: 1, 128>}, {transform_indices = @transform_3, window_bounds = array<i64: 104, 128>}]} {
    %c0_i32 = arith.constant 0 : i32
    %0 = arith.cmpi eq, %arg2, %c0_i32 : i32
    %1 = arith.extui %0 : i1 to i32
    %c0_i32_0 = arith.constant 0 : i32
    %2 = arith.cmpi ne, %1, %c0_i32_0 : i32
    scf.if %2 {
      %cst_10 = arith.constant 0.000000e+00 : f32
      %12 = vector.broadcast %cst_10 : f32 to vector<104x128xf32>
      %c0_11 = arith.constant 0 : index
      %c0_12 = arith.constant 0 : index
      %13 = vector.load %arg6[%c0_11, %c0_12] : memref<104x128xf32, #tpu.memory_space<vmem>>, vector<104x128xf32>
      tpu.vector_store %arg6[%c0_11, %c0_12], %12 {strides = array<i32>} : memref<104x128xf32, #tpu.memory_space<vmem>>, vector<104x128xf32>,
    } else {
    }
    %c0 = arith.constant 0 : index
    %c0_1 = arith.constant 0 : index
    %3 = vector.load %arg6[%c0, %c0_1] : memref<104x128xf32, #tpu.memory_space<vmem>>, vector<104x128xf32>
    %c0_2 = arith.constant 0 : index
    %c0_3 = arith.constant 0 : index
    %4 = vector.load %arg3[%c0_2, %c0_3] : memref<104x256xf32, #tpu.memory_space<vmem>>, vector<104x256xf32>
    %c0_4 = arith.constant 0 : index
    %c0_5 = arith.constant 0 : index
    %5 = vector.load %arg4[%c0_4, %c0_5] : memref<256x128xf32, #tpu.memory_space<vmem>>, vector<256x128xf32>
    %cst = arith.constant dense<0.000000e+00> : vector<104x128xf32>
    %6 = tpu.matmul %4, %5, %cst {dimension_numbers = #tpu.dot_dimension_numbers<[1], [0], [0], [1], [0, 0, 1, 1], [], []>} : vector<104x256xf32>, vector<256x128xf32>, vector<104x128xf32> -> vector<104x128xf32>
    %7 = arith.addf %3, %6 : vector<104x128xf32>
    %c0_6 = arith.constant 0 : index
    %c0_7 = arith.constant 0 : index
    %8 = vector.load %arg6[%c0_6, %c0_7] : memref<104x128xf32, #tpu.memory_space<vmem>>, vector<104x128xf32>
    tpu.vector_store %arg6[%c0_6, %c0_7], %7 {strides = array<i32>} : memref<104x128xf32, #tpu.memory_space<vmem>>, vector<104x128xf32>,
    %c0_i32_8 = arith.constant 0 : i32
    %9 = arith.cmpi eq, %arg2, %c0_i32_8 : i32
    %10 = arith.extui %9 : i1 to i32
    %c0_i32_9 = arith.constant 0 : i32
    %11 = arith.cmpi ne, %10, %c0_i32_9 : i32
    scf.if %11 {
      %c0_10 = arith.constant 0 : index
      %c0_11 = arith.constant 0 : index
      %12 = vector.load %arg6[%c0_10, %c0_11] : memref<104x128xf32, #tpu.memory_space<vmem>>, vector<104x128xf32>
      %c0_12 = arith.constant 0 : index
      %c0_13 = arith.constant 0 : index
      %13 = vector.load %arg5[%c0_12, %c0_13] : memref<1x128xf32, #tpu.memory_space<vmem>>, vector<1x128xf32>
      %14 = vector.broadcast %13 : vector<1x128xf32> to vector<104x128xf32>
      %15 = arith.addf %12, %14 : vector<104x128xf32>
      %c0_14 = arith.constant 0 : index
      %c0_15 = arith.constant 0 : index
      %16 = vector.load %arg6[%c0_14, %c0_15] : memref<104x128xf32, #tpu.memory_space<vmem>>, vector<104x128xf32>
      tpu.vector_store %arg6[%c0_14, %c0_15], %15 {strides = array<i32>} : memref<104x128xf32, #tpu.memory_space<vmem>>, vector<104x128xf32>,
    } else {
    }
    return
  }
  func.func @transform_0(%arg0: i32, %arg1: i32, %arg2: i32) -> (i32, i32) {
    %c0_i32 = arith.constant 0 : i32
    return %arg0, %arg2 : i32, i32
  }
  func.func @transform_1(%arg0: i32, %arg1: i32, %arg2: i32) -> (i32, i32) {
    %c0_i32 = arith.constant 0 : i32
    return %arg2, %arg1 : i32, i32
  }
  func.func @transform_2(%arg0: i32, %arg1: i32, %arg2: i32) -> (i32, i32) {
    %c0_i32 = arith.constant 0 : i32
    %c0_i32_0 = arith.constant 0 : i32
    return %c0_i32, %arg1 : i32, i32
  }
  func.func @transform_3(%arg0: i32, %arg1: i32, %arg2: i32) -> (i32, i32) {
    %c0_i32 = arith.constant 0 : i32
    return %arg0, %arg1 : i32, i32
  }
}

</mosaic_0001>

<llo_original>
// kernel: hgcn_forward.4
$region0: #{hgcn_forward.4}
  #allocation0 [shape = 'u32[]', space=smem, size = 0x4, offset = 0x4, fixed_abs, tag = 'smem constant byte address 0x4 - core index']
  #allocation1 [shape = 'u32[144,128]{1,0:T(1,128)}', space=vmem, size = 0x12000, scoped, tag = 'internal scratch']
  %s0 = inlined_call_operand.vmem [shape: f32[104,128], index: 0, kind: input, shape index: {}]
  %s1 = inlined_call_operand.vmem [shape: f32[128,128], index: 1, kind: input, shape index: {}]
  %s2 = inlined_call_operand.vmem [shape: f32[104,128], index: 2, kind: output, shape index: {}]
  %s3 = sld [smem:[#allocation0]]
  $region22: #{hgcn_forward.4} parent=0
    _
  %s5 = ssub.s32 1, %s3
  %s6 = scalar_select 0, %s5, %s3
  // Predicated region
  $region2: #{hgcn_forward.4} parent=0 // pred_check
    _
  $region3: #{hgcn_forward.4} parent=0 // pred_check_branch
    %8 = sbr.rel (0) target = $region5
  $region4: #{hgcn_forward.4} parent=0 // pred_region
    _
  $region5: #{hgcn_forward.4} parent=0 // pred_fallthru
    _
  // Predicated region
  $region6: #{hgcn_forward.4} parent=0 // pred_check
    _
  $region7: #{hgcn_forward.4} parent=0 // pred_check_branch
    %10 = sbr.rel (0) target = $region9
  $region8: #{hgcn_forward.4} parent=0 // pred_region
    _
  $region9: #{hgcn_forward.4} parent=0 // pred_fallthru
    _
  %p11 = scmp.eq.s32.totalorder 0, 0
  // Predicated region
  $region10: #{hgcn_forward.4} parent=0 // pred_check
    %p12 = pneg %p11
  $region11: #{hgcn_forward.4} parent=0 // pred_check_branch
    %14 = sbr.rel (%p12) target = $region13
  $region12: #{hgcn_forward.4} parent=0 // pred_region
    %15 = vst [vmem:[%s2] sm:$0xff] 0.0
    %16 = vst [vmem:[%s2 + $0x8] sm:$0xff] 0.0
    %17 = vst [vmem:[%s2 + $0x10] sm:$0xff] 0.0
    %18 = vst [vmem:[%s2 + $0x18] sm:$0xff] 0.0
    %19 = vst [vmem:[%s2 + $0x20] sm:$0xff] 0.0
    %20 = vst [vmem:[%s2 + $0x28] sm:$0xff] 0.0
    %21 = vst [vmem:[%s2 + $0x30] sm:$0xff] 0.0
    %22 = vst [vmem:[%s2 + $0x38] sm:$0xff] 0.0
    %23 = vst [vmem:[%s2 + $0x40] sm:$0xff] 0.0
    %24 = vst [vmem:[%s2 + $0x48] sm:$0xff] 0.0
    %25 = vst [vmem:[%s2 + $0x50] sm:$0xff] 0.0
    %26 = vst [vmem:[%s2 + $0x58] sm:$0xff] 0.0
    %27 = vst [vmem:[%s2 + $0x60] sm:$0xff] 0.0
  $region13: #{hgcn_forward.4} parent=0 // pred_fallthru
    _
  %v28 = vld [vmem:[%s2] sm:$0xff]
  %v29 = vld [vmem:[%s2 + $0x8] sm:$0xff]
  %v30 = vld [vmem:[%s2 + $0x10] sm:$0xff]
  %v31 = vld [vmem:[%s2 + $0x18] sm:$0xff]
  %v32 = vld [vmem:[%s2 + $0x20] sm:$0xff]
  %v33 = vld [vmem:[%s2 + $0x28] sm:$0xff]
  %v34 = vld [vmem:[%s2 + $0x30] sm:$0xff]
  %v35 = vld [vmem:[%s2 + $0x38] sm:$0xff]
  %v36 = vld [vmem:[%s2 + $0x40] sm:$0xff]
  %v37 = vld [vmem:[%s2 + $0x48] sm:$0xff]
  %v38 = vld [vmem:[%s2 + $0x50] sm:$0xff]
  %v39 = vld [vmem:[%s2 + $0x58] sm:$0xff]
  %v40 = vld [vmem:[%s2 + $0x60] sm:$0xff]
  %v41 = vld [vmem:[%s0] sm:$0xff]
  %v42 = vld [vmem:[%s0 + $0x8] sm:$0xff]
  %v43 = vld [vmem:[%s0 + $0x10] sm:$0xff]
  %v44 = vld [vmem:[%s0 + $0x18] sm:$0xff]
  %v45 = vld [vmem:[%s0 + $0x20] sm:$0xff]
  %v46 = vld [vmem:[%s0 + $0x28] sm:$0xff]
  %v47 = vld [vmem:[%s0 + $0x30] sm:$0xff]
  %v48 = vld [vmem:[%s0 + $0x38] sm:$0xff]
  %v49 = vld [vmem:[%s0 + $0x40] sm:$0xff]
  %v50 = vld [vmem:[%s0 + $0x48] sm:$0xff]
  %v51 = vld [vmem:[%s0 + $0x50] sm:$0xff]
  %v52 = vld [vmem:[%s0 + $0x58] sm:$0xff]
  %v53 = vld [vmem:[%s0 + $0x60] sm:$0xff]
  %v54 = vld [vmem:[%s1] sm:$0xff]
  %v55 = vld [vmem:[%s1 + $0x8] sm:$0xff]
  %v56 = vld [vmem:[%s1 + $0x10] sm:$0xff]
  %v57 = vld [vmem:[%s1 + $0x18] sm:$0xff]
  %v58 = vld [vmem:[%s1 + $0x20] sm:$0xff]
  %v59 = vld [vmem:[%s1 + $0x28] sm:$0xff]
  %v60 = vld [vmem:[%s1 + $0x30] sm:$0xff]
  %v61 = vld [vmem:[%s1 + $0x38] sm:$0xff]
  %v62 = vld [vmem:[%s1 + $0x40] sm:$0xff]
  %v63 = vld [vmem:[%s1 + $0x48] sm:$0xff]
  %v64 = vld [vmem:[%s1 + $0x50] sm:$0xff]
  %v65 = vld [vmem:[%s1 + $0x58] sm:$0xff]
  %v66 = vld [vmem:[%s1 + $0x60] sm:$0xff]
  %v67 = vld [vmem:[%s1 + $0x68] sm:$0xff]
  %v68 = vld [vmem:[%s1 + $0x70] sm:$0xff]
  %v69 = vld [vmem:[%s1 + $0x78] sm:$0xff]
  %70 = vmatprep.subr.mxu0 0.0
  %71 = vmatpush1.msra.mxu0 %v69
  %72 = vmatprep.subr.mxu0 0.0
  %73 = vmatpush1.msra.mxu0 %v68
  %74 = vmatprep.subr.mxu0 0.0
  %75 = vmatpush1.msra.mxu0 %v67
  %76 = vmatprep.subr.mxu0 0.0
  %77 = vmatpush1.msra.mxu0 %v66
  %78 = vmatprep.subr.mxu0 0.0
  %79 = vmatpush1.msra.mxu0 %v65
  %80 = vmatprep.subr.mxu0 0.0
  %81 = vmatpush1.msra.mxu0 %v64
  %82 = vmatprep.subr.mxu0 0.0
  %83 = vmatpush1.msra.mxu0 %v63
  %84 = vmatprep.subr.mxu0 0.0
  %85 = vmatpush1.msra.mxu0 %v62
  %86 = vmatprep.subr.mxu0 0.0
  %87 = vmatpush1.msra.mxu0 %v61
  %88 = vmatprep.subr.mxu0 0.0
  %89 = vmatpush1.msra.mxu0 %v60
  %90 = vmatprep.subr.mxu0 0.0
  %91 = vmatpush1.msra.mxu0 %v59
  %92 = vmatprep.subr.mxu0 0.0
  %93 = vmatpush1.msra.mxu0 %v58
  %94 = vmatprep.subr.mxu0 0.0
  %95 = vmatpush1.msra.mxu0 %v57
  %96 = vmatprep.subr.mxu0 0.0
  %97 = vmatpush1.msra.mxu0 %v56
  %98 = vmatprep.subr.mxu0 0.0
  %99 = vmatpush1.msra.mxu0 %v55
  %100 = vmatprep.subr.mxu0 0.0
  %101 = vmatpush1.msra.mxu0 %v54
  %102 = vmatprep.subr.mxu0 0.0
  %103 = vmatpush2.msra.mxu0 0.0
  %104 = vmatprep.subr.mxu0 0.0
  %105 = vmatpush2.msra.mxu0 0.0
  %106 = vmatprep.subr.mxu0 0.0
  %107 = vmatpush2.msra.mxu0 0.0
  %108 = vmatprep.subr.mxu0 0.0
  %109 = vmatpush2.msra.mxu0 0.0
  %110 = vmatprep.subr.mxu0 0.0
  %111 = vmatpush2.msra.mxu0 0.0
  %112 = vmatprep.subr.mxu0 0.0
  %113 = vmatpush2.msra.mxu0 0.0
  %114 = vmatprep.subr.mxu0 0.0
  %115 = vmatpush2.msra.mxu0 0.0
  %116 = vmatprep.subr.mxu0 0.0
  %117 = vmatpush2.msra.mxu0 0.0
  %118 = vmatprep.subr.mxu0 0.0
  %119 = vmatpush2.msra.mxu0 0.0
  %120 = vmatprep.subr.mxu0 0.0
  %121 = vmatpush2.msra.mxu0 0.0
  %122 = vmatprep.subr.mxu0 0.0
  %123 = vmatpush2.msra.mxu0 0.0
  %124 = vmatprep.subr.mxu0 0.0
  %125 = vmatpush2.msra.mxu0 0.0
  %126 = vmatprep.subr.mxu0 0.0
  %127 = vmatpush2.msra.mxu0 0.0
  %128 = vmatprep.subr.mxu0 0.0
  %129 = vmatpush2.msra.mxu0 0.0
  %130 = vmatprep.subr.mxu0 0.0
  %131 = vmatpush2.msra.mxu0 0.0
  %132 = vmatprep.subr.mxu0 0.0
  %133 = vmatpush2.msra.mxu0 0.0
  %134 = vmatprep.mubr.f32.mxu0 0.0
  %135 = vmatmul.mubr.f32.gmra.mxu0 %v41
  %v136 = vpop.f32.mrf.mxu0
  %v137 = vadd.f32 0.0, %v136
  %v138 = vpop.f32.mrf.mxu0
  %139 = vmatprep.mubr.f32.mxu0 0.0
  %140 = vmatmul.mubr.f32.gmra.mxu0 %v42
  %v141 = vpop.f32.mrf.mxu0
  %v142 = vadd.f32 0.0, %v141
  %v143 = vpop.f32.mrf.mxu0
  %144 = vmatprep.mubr.f32.mxu0 0.0
  %145 = vmatmul.mubr.f32.gmra.mxu0 %v43
  %v146 = vpop.f32.mrf.mxu0
  %v147 = vadd.f32 0.0, %v146
  %v148 = vpop.f32.mrf.mxu0
  %149 = vmatprep.mubr.f32.mxu0 0.0
  %150 = vmatmul.mubr.f32.gmra.mxu0 %v44
  %v151 = vpop.f32.mrf.mxu0
  %v152 = vadd.f32 0.0, %v151
  %v153 = vpop.f32.mrf.mxu0
  %154 = vmatprep.mubr.f32.mxu0 0.0
  %155 = vmatmul.mubr.f32.gmra.mxu0 %v45
  %v156 = vpop.f32.mrf.mxu0
  %v157 = vadd.f32 0.0, %v156
  %v158 = vpop.f32.mrf.mxu0
  %159 = vmatprep.mubr.f32.mxu0 0.0
  %160 = vmatmul.mubr.f32.gmra.mxu0 %v46
  %v161 = vpop.f32.mrf.mxu0
  %v162 = vadd.f32 0.0, %v161
  %v163 = vpop.f32.mrf.mxu0
  %164 = vmatprep.mubr.f32.mxu0 0.0
  %165 = vmatmul.mubr.f32.gmra.mxu0 %v47
  %v166 = vpop.f32.mrf.mxu0
  %v167 = vadd.f32 0.0, %v166
  %v168 = vpop.f32.mrf.mxu0
  %169 = vmatprep.mubr.f32.mxu0 0.0
  %170 = vmatmul.mubr.f32.gmra.mxu0 %v48
  %v171 = vpop.f32.mrf.mxu0
  %v172 = vadd.f32 0.0, %v171
  %v173 = vpop.f32.mrf.mxu0
  %174 = vmatprep.mubr.f32.mxu0 0.0
  %175 = vmatmul.mubr.f32.gmra.mxu0 %v49
  %v176 = vpop.f32.mrf.mxu0
  %v177 = vadd.f32 0.0, %v176
  %v178 = vpop.f32.mrf.mxu0
  %179 = vmatprep.mubr.f32.mxu0 0.0
  %180 = vmatmul.mubr.f32.gmra.mxu0 %v50
  %v181 = vpop.f32.mrf.mxu0
  %v182 = vadd.f32 0.0, %v181
  %v183 = vpop.f32.mrf.mxu0
  %184 = vmatprep.mubr.f32.mxu0 0.0
  %185 = vmatmul.mubr.f32.gmra.mxu0 %v51
  %v186 = vpop.f32.mrf.mxu0
  %v187 = vadd.f32 0.0, %v186
  %v188 = vpop.f32.mrf.mxu0
  %189 = vmatprep.mubr.f32.mxu0 0.0
  %190 = vmatmul.mubr.f32.gmra.mxu0 %v52
  %v191 = vpop.f32.mrf.mxu0
  %v192 = vadd.f32 0.0, %v191
  %v193 = vpop.f32.mrf.mxu0
  %194 = vmatprep.mubr.f32.mxu0 0.0
  %195 = vmatmul.mubr.f32.gmra.mxu0 %v53
  %v196 = vpop.f32.mrf.mxu0
  %v197 = vadd.f32 0.0, %v196
  %v198 = vpop.f32.mrf.mxu0
  %199 = vdwg.mxu0
  %v200 = vadd.f32 %v28, %v137
  %v201 = vadd.f32 %v29, %v142
  %v202 = vadd.f32 %v30, %v147
  %v203 = vadd.f32 %v31, %v152
  %v204 = vadd.f32 %v32, %v157
  %v205 = vadd.f32 %v33, %v162
  %v206 = vadd.f32 %v34, %v167
  %v207 = vadd.f32 %v35, %v172
  %v208 = vadd.f32 %v36, %v177
  %v209 = vadd.f32 %v37, %v182
  %v210 = vadd.f32 %v38, %v187
  %v211 = vadd.f32 %v39, %v192
  %v212 = vadd.f32 %v40, %v197
  %213 = vst [vmem:[%s2] sm:$0xff] %v200
  %214 = vst [vmem:[%s2 + $0x8] sm:$0xff] %v201
  %215 = vst [vmem:[%s2 + $0x10] sm:$0xff] %v202
  %216 = vst [vmem:[%s2 + $0x18] sm:$0xff] %v203
  %217 = vst [vmem:[%s2 + $0x20] sm:$0xff] %v204
  %218 = vst [vmem:[%s2 + $0x28] sm:$0xff] %v205
  %219 = vst [vmem:[%s2 + $0x30] sm:$0xff] %v206
  %220 = vst [vmem:[%s2 + $0x38] sm:$0xff] %v207
  %221 = vst [vmem:[%s2 + $0x40] sm:$0xff] %v208
  %222 = vst [vmem:[%s2 + $0x48] sm:$0xff] %v209
  %223 = vst [vmem:[%s2 + $0x50] sm:$0xff] %v210
  %224 = vst [vmem:[%s2 + $0x58] sm:$0xff] %v211
  %225 = vst [vmem:[%s2 + $0x60] sm:$0xff] %v212
  // Predicated region
  $region14: #{hgcn_forward.4} parent=0 // pred_check
    _
  $region15: #{hgcn_forward.4} parent=0 // pred_check_branch
    %227 = sbr.rel (0) target = $region17
  $region16: #{hgcn_forward.4} parent=0 // pred_region
    _
  $region17: #{hgcn_forward.4} parent=0 // pred_fallthru
    _
  // Predicated region
  $region18: #{hgcn_forward.4} parent=0 // pred_check
    _
  $region19: #{hgcn_forward.4} parent=0 // pred_check_branch
    %229 = sbr.rel (0) target = $region21
  $region20: #{hgcn_forward.4} parent=0 // pred_region
    _
  $region21: #{hgcn_forward.4} parent=0 // pred_fallthru
    _

// kernel: hgcn_forward.5
$region0: #{hgcn_forward.5}
  #allocation0 [shape = 'u32[]', space=smem, size = 0x4, offset = 0x4, fixed_abs, tag = 'smem constant byte address 0x4 - core index']
  #allocation1 [shape = 'u32[144,128]{1,0:T(1,128)}', space=vmem, size = 0x12000, scoped, tag = 'internal scratch']
  %s0 = inlined_call_operand.vmem [shape: f32[256,128], index: 0, kind: input, shape index: {}]
  %s1 = inlined_call_operand.vmem [shape: f32[128,128], index: 1, kind: input, shape index: {}]
  %s2 = inlined_call_operand.vmem [shape: f32[256,128], index: 2, kind: output, shape index: {}]
  %s3 = sld [smem:[#allocation0]]
  $region22: #{hgcn_forward.5} parent=0
    _
  %s5 = ssub.s32 1, %s3
  %s6 = scalar_select 0, %s5, %s3
  // Predicated region
  $region2: #{hgcn_forward.5} parent=0 // pred_check
    _
  $region3: #{hgcn_forward.5} parent=0 // pred_check_branch
    %8 = sbr.rel (0) target = $region5
  $region4: #{hgcn_forward.5} parent=0 // pred_region
    _
  $region5: #{hgcn_forward.5} parent=0 // pred_fallthru
    _
  // Predicated region
  $region6: #{hgcn_forward.5} parent=0 // pred_check
    _
  $region7: #{hgcn_forward.5} parent=0 // pred_check_branch
    %10 = sbr.rel (0) target = $region9
  $region8: #{hgcn_forward.5} parent=0 // pred_region
    _
  $region9: #{hgcn_forward.5} parent=0 // pred_fallthru
    _
  %p11 = scmp.eq.s32.totalorder 0, 0
  // Predicated region
  $region10: #{hgcn_forward.5} parent=0 // pred_check
    %p12 = pneg %p11
  $region11: #{hgcn_forward.5} parent=0 // pred_check_branch
    %14 = sbr.rel (%p12) target = $region13
  $region12: #{hgcn_forward.5} parent=0 // pred_region
    %15 = vst [vmem:[%s2] sm:$0xff] 0.0
    %16 = vst [vmem:[%s2 + $0x8] sm:$0xff] 0.0
    %17 = vst [vmem:[%s2 + $0x10] sm:$0xff] 0.0
    %18 = vst [vmem:[%s2 + $0x18] sm:$0xff] 0.0
    %19 = vst [vmem:[%s2 + $0x20] sm:$0xff] 0.0
    %20 = vst [vmem:[%s2 + $0x28] sm:$0xff] 0.0
    %21 = vst [vmem:[%s2 + $0x30] sm:$0xff] 0.0
    %22 = vst [vmem:[%s2 + $0x38] sm:$0xff] 0.0
    %23 = vst [vmem:[%s2 + $0x40] sm:$0xff] 0.0
    %24 = vst [vmem:[%s2 + $0x48] sm:$0xff] 0.0
    %25 = vst [vmem:[%s2 + $0x50] sm:$0xff] 0.0
    %26 = vst [vmem:[%s2 + $0x58] sm:$0xff] 0.0
    %27 = vst [vmem:[%s2 + $0x60] sm:$0xff] 0.0
    %28 = vst [vmem:[%s2 + $0x68] sm:$0xff] 0.0
    %29 = vst [vmem:[%s2 + $0x70] sm:$0xff] 0.0
    %30 = vst [vmem:[%s2 + $0x78] sm:$0xff] 0.0
    %31 = vst [vmem:[%s2 + $0x80] sm:$0xff] 0.0
    %32 = vst [vmem:[%s2 + $0x88] sm:$0xff] 0.0
    %33 = vst [vmem:[%s2 + $0x90] sm:$0xff] 0.0
    %34 = vst [vmem:[%s2 + $0x98] sm:$0xff] 0.0
    %35 = vst [vmem:[%s2 + $0xa0] sm:$0xff] 0.0
    %36 = vst [vmem:[%s2 + $0xa8] sm:$0xff] 0.0
    %37 = vst [vmem:[%s2 + $0xb0] sm:$0xff] 0.0
    %38 = vst [vmem:[%s2 + $0xb8] sm:$0xff] 0.0
    %39 = vst [vmem:[%s2 + $0xc0] sm:$0xff] 0.0
    %40 = vst [vmem:[%s2 + $0xc8] sm:$0xff] 0.0
    %41 = vst [vmem:[%s2 + $0xd0] sm:$0xff] 0.0
    %42 = vst [vmem:[%s2 + $0xd8] sm:$0xff] 0.0
    %43 = vst [vmem:[%s2 + $0xe0] sm:$0xff] 0.0
    %44 = vst [vmem:[%s2 + $0xe8] sm:$0xff] 0.0
    %45 = vst [vmem:[%s2 + $0xf0] sm:$0xff] 0.0
    %46 = vst [vmem:[%s2 + $0xf8] sm:$0xff] 0.0
  $region13: #{hgcn_forward.5} parent=0 // pred_fallthru
    _
  %v47 = vld [vmem:[%s2] sm:$0xff]
  %v48 = vld [vmem:[%s2 + $0x8] sm:$0xff]
  %v49 = vld [vmem:[%s2 + $0x10] sm:$0xff]
  %v50 = vld [vmem:[%s2 + $0x18] sm:$0xff]
  %v51 = vld [vmem:[%s2 + $0x20] sm:$0xff]
  %v52 = vld [vmem:[%s2 + $0x28] sm:$0xff]
  %v53 = vld [vmem:[%s2 + $0x30] sm:$0xff]
  %v54 = vld [vmem:[%s2 + $0x38] sm:$0xff]
  %v55 = vld [vmem:[%s2 + $0x40] sm:$0xff]
  %v56 = vld [vmem:[%s2 + $0x48] sm:$0xff]
  %v57 = vld [vmem:[%s2 + $0x50] sm:$0xff]
  %v58 = vld [vmem:[%s2 + $0x58] sm:$0xff]
  %v59 = vld [vmem:[%s2 + $0x60] sm:$0xff]
  %v60 = vld [vmem:[%s2 + $0x68] sm:$0xff]
  %v61 = vld [vmem:[%s2 + $0x70] sm:$0xff]
  %v62 = vld [vmem:[%s2 + $0x78] sm:$0xff]
  %v63 = vld [vmem:[%s2 + $0x80] sm:$0xff]
  %v64 = vld [vmem:[%s2 + $0x88] sm:$0xff]
  %v65 = vld [vmem:[%s2 + $0x90] sm:$0xff]
  %v66 = vld [vmem:[%s2 + $0x98] sm:$0xff]
  %v67 = vld [vmem:[%s2 + $0xa0] sm:$0xff]
  %v68 = vld [vmem:[%s2 + $0xa8] sm:$0xff]
  %v69 = vld [vmem:[%s2 + $0xb0] sm:$0xff]
  %v70 = vld [vmem:[%s2 + $0xb8] sm:$0xff]
  %v71 = vld [vmem:[%s2 + $0xc0] sm:$0xff]
  %v72 = vld [vmem:[%s2 + $0xc8] sm:$0xff]
  %v73 = vld [vmem:[%s2 + $0xd0] sm:$0xff]
  %v74 = vld [vmem:[%s2 + $0xd8] sm:$0xff]
  %v75 = vld [vmem:[%s2 + $0xe0] sm:$0xff]
  %v76 = vld [vmem:[%s2 + $0xe8] sm:$0xff]
  %v77 = vld [vmem:[%s2 + $0xf0] sm:$0xff]
  %v78 = vld [vmem:[%s2 + $0xf8] sm:$0xff]
  %v79 = vld [vmem:[%s0] sm:$0xff]
  %v80 = vld [vmem:[%s0 + $0x8] sm:$0xff]
  %v81 = vld [vmem:[%s0 + $0x10] sm:$0xff]
  %v82 = vld [vmem:[%s0 + $0x18] sm:$0xff]
  %v83 = vld [vmem:[%s0 + $0x20] sm:$0xff]
  %v84 = vld [vmem:[%s0 + $0x28] sm:$0xff]
  %v85 = vld [vmem:[%s0 + $0x30] sm:$0xff]
  %v86 = vld [vmem:[%s0 + $0x38] sm:$0xff]
  %v87 = vld [vmem:[%s0 + $0x40] sm:$0xff]
  %v88 = vld [vmem:[%s0 + $0x48] sm:$0xff]
  %v89 = vld [vmem:[%s0 + $0x50] sm:$0xff]
  %v90 = vld [vmem:[%s0 + $0x58] sm:$0xff]
  %v91 = vld [vmem:[%s0 + $0x60] sm:$0xff]
  %v92 = vld [vmem:[%s0 + $0x68] sm:$0xff]
  %v93 = vld [vmem:[%s0 + $0x70] sm:$0xff]
  %v94 = vld [vmem:[%s0 + $0x78] sm:$0xff]
  %v95 = vld [vmem:[%s0 + $0x80] sm:$0xff]
  %v96 = vld [vmem:[%s0 + $0x88] sm:$0xff]
  %v97 = vld [vmem:[%s0 + $0x90] sm:$0xff]
  %v98 = vld [vmem:[%s0 + $0x98] sm:$0xff]
  %v99 = vld [vmem:[%s0 + $0xa0] sm:$0xff]
  %v100 = vld [vmem:[%s0 + $0xa8] sm:$0xff]
  %v101 = vld [vmem:[%s0 + $0xb0] sm:$0xff]
  %v102 = vld [vmem:[%s0 + $0xb8] sm:$0xff]
  %v103 = vld [vmem:[%s0 + $0xc0] sm:$0xff]
  %v104 = vld [vmem:[%s0 + $0xc8] sm:$0xff]
  %v105 = vld [vmem:[%s0 + $0xd0] sm:$0xff]
  %v106 = vld [vmem:[%s0 + $0xd8] sm:$0xff]
  %v107 = vld [vmem:[%s0 + $0xe0] sm:$0xff]
  %v108 = vld [vmem:[%s0 + $0xe8] sm:$0xff]
  %v109 = vld [vmem:[%s0 + $0xf0] sm:$0xff]
  %v110 = vld [vmem:[%s0 + $0xf8] sm:$0xff]
  %v111 = vld [vmem:[%s1] sm:$0xff]
  %v112 = vld [vmem:[%s1 + $0x8] sm:$0xff]
  %v113 = vld [vmem:[%s1 + $0x10] sm:$0xff]
  %v114 = vld [vmem:[%s1 + $0x18] sm:$0xff]
  %v115 = vld [vmem:[%s1 + $0x20] sm:$0xff]
  %v116 = vld [vmem:[%s1 + $0x28] sm:$0xff]
  %v117 = vld [vmem:[%s1 + $0x30] sm:$0xff]
  %v118 = vld [vmem:[%s1 + $0x38] sm:$0xff]
  %v119 = vld [vmem:[%s1 + $0x40] sm:$0xff]
  %v120 = vld [vmem:[%s1 + $0x48] sm:$0xff]
  %v121 = vld [vmem:[%s1 + $0x50] sm:$0xff]
  %v122 = vld [vmem:[%s1 + $0x58] sm:$0xff]
  %v123 = vld [vmem:[%s1 + $0x60] sm:$0xff]
  %v124 = vld [vmem:[%s1 + $0x68] sm:$0xff]
  %v125 = vld [vmem:[%s1 + $0x70] sm:$0xff]
  %v126 = vld [vmem:[%s1 + $0x78] sm:$0xff]
  %127 = vmatprep.subr.mxu0 0.0
  %128 = vmatpush1.msra.mxu0 %v126
  %129 = vmatprep.subr.mxu0 0.0
  %130 = vmatpush1.msra.mxu0 %v125
  %131 = vmatprep.subr.mxu0 0.0
  %132 = vmatpush1.msra.mxu0 %v124
  %133 = vmatprep.subr.mxu0 0.0
  %134 = vmatpush1.msra.mxu0 %v123
  %135 = vmatprep.subr.mxu0 0.0
  %136 = vmatpush1.msra.mxu0 %v122
  %137 = vmatprep.subr.mxu0 0.0
  %138 = vmatpush1.msra.mxu0 %v121
  %139 = vmatprep.subr.mxu0 0.0
  %140 = vmatpush1.msra.mxu0 %v120
  %141 = vmatprep.subr.mxu0 0.0
  %142 = vmatpush1.msra.mxu0 %v119
  %143 = vmatprep.subr.mxu0 0.0
  %144 = vmatpush1.msra.mxu0 %v118
  %145 = vmatprep.subr.mxu0 0.0
  %146 = vmatpush1.msra.mxu0 %v117
  %147 = vmatprep.subr.mxu0 0.0
  %148 = vmatpush1.msra.mxu0 %v116
  %149 = vmatprep.subr.mxu0 0.0
  %150 = vmatpush1.msra.mxu0 %v115
  %151 = vmatprep.subr.mxu0 0.0
  %152 = vmatpush1.msra.mxu0 %v114
  %153 = vmatprep.subr.mxu0 0.0
  %154 = vmatpush1.msra.mxu0 %v113
  %155 = vmatprep.subr.mxu0 0.0
  %156 = vmatpush1.msra.mxu0 %v112
  %157 = vmatprep.subr.mxu0 0.0
  %158 = vmatpush1.msra.mxu0 %v111
  %159 = vmatprep.subr.mxu0 0.0
  %160 = vmatpush2.msra.mxu0 0.0
  %161 = vmatprep.subr.mxu0 0.0
  %162 = vmatpush2.msra.mxu0 0.0
  %163 = vmatprep.subr.mxu0 0.0
  %164 = vmatpush2.msra.mxu0 0.0
  %165 = vmatprep.subr.mxu0 0.0
  %166 = vmatpush2.msra.mxu0 0.0
  %167 = vmatprep.subr.mxu0 0.0
  %168 = vmatpush2.msra.mxu0 0.0
  %169 = vmatprep.subr.mxu0 0.0
  %170 = vmatpush2.msra.mxu0 0.0
  %171 = vmatprep.subr.mxu0 0.0
  %172 = vmatpush2.msra.mxu0 0.0
  %173 = vmatprep.subr.mxu0 0.0
  %174 = vmatpush2.msra.mxu0 0.0
  %175 = vmatprep.subr.mxu0 0.0
  %176 = vmatpush2.msra.mxu0 0.0
  %177 = vmatprep.subr.mxu0 0.0
  %178 = vmatpush2.msra.mxu0 0.0
  %179 = vmatprep.subr.mxu0 0.0
  %180 = vmatpush2.msra.mxu0 0.0
  %181 = vmatprep.subr.mxu0 0.0
  %182 = vmatpush2.msra.mxu0 0.0
  %183 = vmatprep.subr.mxu0 0.0
  %184 = vmatpush2.msra.mxu0 0.0
  %185 = vmatprep.subr.mxu0 0.0
  %186 = vmatpush2.msra.mxu0 0.0
  %187 = vmatprep.subr.mxu0 0.0
  %188 = vmatpush2.msra.mxu0 0.0
  %189 = vmatprep.subr.mxu0 0.0
  %190 = vmatpush2.msra.mxu0 0.0
  %191 = vmatprep.mubr.f32.mxu0 0.0
  %192 = vmatmul.mubr.f32.gmra.mxu0 %v79
  %v193 = vpop.f32.mrf.mxu0
  %v194 = vadd.f32 0.0, %v193
  %v195 = vpop.f32.mrf.mxu0
  %196 = vmatprep.mubr.f32.mxu0 0.0
  %197 = vmatmul.mubr.f32.gmra.mxu0 %v80
  %v198 = vpop.f32.mrf.mxu0
  %v199 = vadd.f32 0.0, %v198
  %v200 = vpop.f32.mrf.mxu0
  %201 = vmatprep.mubr.f32.mxu0 0.0
  %202 = vmatmul.mubr.f32.gmra.mxu0 %v81
  %v203 = vpop.f32.mrf.mxu0
  %v204 = vadd.f32 0.0, %v203
  %v205 = vpop.f32.mrf.mxu0
  %206 = vmatprep.mubr.f32.mxu0 0.0
  %207 = vmatmul.mubr.f32.gmra.mxu0 %v82
  %v208 = vpop.f32.mrf.mxu0
  %v209 = vadd.f32 0.0, %v208
  %v210 = vpop.f32.mrf.mxu0
  %211 = vmatprep.mubr.f32.mxu0 0.0
  %212 = vmatmul.mubr.f32.gmra.mxu0 %v83
  %v213 = vpop.f32.mrf.mxu0
  %v214 = vadd.f32 0.0, %v213
  %v215 = vpop.f32.mrf.mxu0
  %216 = vmatprep.mubr.f32.mxu0 0.0
  %217 = vmatmul.mubr.f32.gmra.mxu0 %v84
  %v218 = vpop.f32.mrf.mxu0
  %v219 = vadd.f32 0.0, %v218
  %v220 = vpop.f32.mrf.mxu0
  %221 = vmatprep.mubr.f32.mxu0 0.0
  %222 = vmatmul.mubr.f32.gmra.mxu0 %v85
  %v223 = vpop.f32.mrf.mxu0
  %v224 = vadd.f32 0.0, %v223
  %v225 = vpop.f32.mrf.mxu0
  %226 = vmatprep.mubr.f32.mxu0 0.0
  %227 = vmatmul.mubr.f32.gmra.mxu0 %v86
  %v228 = vpop.f32.mrf.mxu0
  %v229 = vadd.f32 0.0, %v228
  %v230 = vpop.f32.mrf.mxu0
  %231 = vmatprep.mubr.f32.mxu0 0.0
  %232 = vmatmul.mubr.f32.gmra.mxu0 %v87
  %v233 = vpop.f32.mrf.mxu0
  %v234 = vadd.f32 0.0, %v233
  %v235 = vpop.f32.mrf.mxu0
  %236 = vmatprep.mubr.f32.mxu0 0.0
  %237 = vmatmul.mubr.f32.gmra.mxu0 %v88
  %v238 = vpop.f32.mrf.mxu0
  %v239 = vadd.f32 0.0, %v238
  %v240 = vpop.f32.mrf.mxu0
  %241 = vmatprep.mubr.f32.mxu0 0.0
  %242 = vmatmul.mubr.f32.gmra.mxu0 %v89
  %v243 = vpop.f32.mrf.mxu0
  %v244 = vadd.f32 0.0, %v243
  %v245 = vpop.f32.mrf.mxu0
  %246 = vmatprep.mubr.f32.mxu0 0.0
  %247 = vmatmul.mubr.f32.gmra.mxu0 %v90
  %v248 = vpop.f32.mrf.mxu0
  %v249 = vadd.f32 0.0, %v248
  %v250 = vpop.f32.mrf.mxu0
  %251 = vmatprep.mubr.f32.mxu0 0.0
  %252 = vmatmul.mubr.f32.gmra.mxu0 %v91
  %v253 = vpop.f32.mrf.mxu0
  %v254 = vadd.f32 0.0, %v253
  %v255 = vpop.f32.mrf.mxu0
  %256 = vmatprep.mubr.f32.mxu0 0.0
  %257 = vmatmul.mubr.f32.gmra.mxu0 %v92
  %v258 = vpop.f32.mrf.mxu0
  %v259 = vadd.f32 0.0, %v258
  %v260 = vpop.f32.mrf.mxu0
  %261 = vmatprep.mubr.f32.mxu0 0.0
  %262 = vmatmul.mubr.f32.gmra.mxu0 %v93
  %v263 = vpop.f32.mrf.mxu0
  %v264 = vadd.f32 0.0, %v263
  %v265 = vpop.f32.mrf.mxu0
  %266 = vmatprep.mubr.f32.mxu0 0.0
  %267 = vmatmul.mubr.f32.gmra.mxu0 %v94
  %v268 = vpop.f32.mrf.mxu0
  %v269 = vadd.f32 0.0, %v268
  %v270 = vpop.f32.mrf.mxu0
  %271 = vmatprep.mubr.f32.mxu0 0.0
  %272 = vmatmul.mubr.f32.gmra.mxu0 %v95
  %v273 = vpop.f32.mrf.mxu0
  %v274 = vadd.f32 0.0, %v273
  %v275 = vpop.f32.mrf.mxu0
  %276 = vmatprep.mubr.f32.mxu0 0.0
  %277 = vmatmul.mubr.f32.gmra.mxu0 %v96
  %v278 = vpop.f32.mrf.mxu0
  %v279 = vadd.f32 0.0, %v278
  %v280 = vpop.f32.mrf.mxu0
  %281 = vmatprep.mubr.f32.mxu0 0.0
  %282 = vmatmul.mubr.f32.gmra.mxu0 %v97
  %v283 = vpop.f32.mrf.mxu0
  %v284 = vadd.f32 0.0, %v283
  %v285 = vpop.f32.mrf.mxu0
  %286 = vmatprep.mubr.f32.mxu0 0.0
  %287 = vmatmul.mubr.f32.gmra.mxu0 %v98
  %v288 = vpop.f32.mrf.mxu0
  %v289 = vadd.f32 0.0, %v288
  %v290 = vpop.f32.mrf.mxu0
  %291 = vmatprep.mubr.f32.mxu0 0.0
  %292 = vmatmul.mubr.f32.gmra.mxu0 %v99
  %v293 = vpop.f32.mrf.mxu0
  %v294 = vadd.f32 0.0, %v293
  %v295 = vpop.f32.mrf.mxu0
  %296 = vmatprep.mubr.f32.mxu0 0.0
  %297 = vmatmul.mubr.f32.gmra.mxu0 %v100
  %v298 = vpop.f32.mrf.mxu0
  %v299 = vadd.f32 0.0, %v298
  %v300 = vpop.f32.mrf.mxu0
  %301 = vmatprep.mubr.f32.mxu0 0.0
  %302 = vmatmul.mubr.f32.gmra.mxu0 %v101
  %v303 = vpop.f32.mrf.mxu0
  %v304 = vadd.f32 0.0, %v303
  %v305 = vpop.f32.mrf.mxu0
  %306 = vmatprep.mubr.f32.mxu0 0.0
  %307 = vmatmul.mubr.f32.gmra.mxu0 %v102
  %v308 = vpop.f32.mrf.mxu0
  %v309 = vadd.f32 0.0, %v308
  %v310 = vpop.f32.mrf.mxu0
  %311 = vmatprep.mubr.f32.mxu0 0.0
  %312 = vmatmul.mubr.f32.gmra.mxu0 %v103
  %v313 = vpop.f32.mrf.mxu0
  %v314 = vadd.f32 0.0, %v313
  %v315 = vpop.f32.mrf.mxu0
  %316 = vmatprep.mubr.f32.mxu0 0.0
  %317 = vmatmul.mubr.f32.gmra.mxu0 %v104
  %v318 = vpop.f32.mrf.mxu0
  %v319 = vadd.f32 0.0, %v318
  %v320 = vpop.f32.mrf.mxu0
  %321 = vmatprep.mubr.f32.mxu0 0.0
  %322 = vmatmul.mubr.f32.gmra.mxu0 %v105
  %v323 = vpop.f32.mrf.mxu0
  %v324 = vadd.f32 0.0, %v323
  %v325 = vpop.f32.mrf.mxu0
  %326 = vmatprep.mubr.f32.mxu0 0.0
  %327 = vmatmul.mubr.f32.gmra.mxu0 %v106
  %v328 = vpop.f32.mrf.mxu0
  %v329 = vadd.f32 0.0, %v328
  %v330 = vpop.f32.mrf.mxu0
  %331 = vmatprep.mubr.f32.mxu0 0.0
  %332 = vmatmul.mubr.f32.gmra.mxu0 %v107
  %v333 = vpop.f32.mrf.mxu0
  %v334 = vadd.f32 0.0, %v333
  %v335 = vpop.f32.mrf.mxu0
  %336 = vmatprep.mubr.f32.mxu0 0.0
  %337 = vmatmul.mubr.f32.gmra.mxu0 %v108
  %v338 = vpop.f32.mrf.mxu0
  %v339 = vadd.f32 0.0, %v338
  %v340 = vpop.f32.mrf.mxu0
  %341 = vmatprep.mubr.f32.mxu0 0.0
  %342 = vmatmul.mubr.f32.gmra.mxu0 %v109
  %v343 = vpop.f32.mrf.mxu0
  %v344 = vadd.f32 0.0, %v343
  %v345 = vpop.f32.mrf.mxu0
  %346 = vmatprep.mubr.f32.mxu0 0.0
  %347 = vmatmul.mubr.f32.gmra.mxu0 %v110
  %v348 = vpop.f32.mrf.mxu0
  %v349 = vadd.f32 0.0, %v348
  %v350 = vpop.f32.mrf.mxu0
  %351 = vdwg.mxu0
  %v352 = vadd.f32 %v47, %v194
  %v353 = vadd.f32 %v48, %v199
  %v354 = vadd.f32 %v49, %v204
  %v355 = vadd.f32 %v50, %v209
  %v356 = vadd.f32 %v51, %v214
  %v357 = vadd.f32 %v52, %v219
  %v358 = vadd.f32 %v53, %v224
  %v359 = vadd.f32 %v54, %v229
  %v360 = vadd.f32 %v55, %v234
  %v361 = vadd.f32 %v56, %v239
  %v362 = vadd.f32 %v57, %v244
  %v363 = vadd.f32 %v58, %v249
  %v364 = vadd.f32 %v59, %v254
  %v365 = vadd.f32 %v60, %v259
  %v366 = vadd.f32 %v61, %v264
  %v367 = vadd.f32 %v62, %v269
  %v368 = vadd.f32 %v63, %v274
  %v369 = vadd.f32 %v64, %v279
  %v370 = vadd.f32 %v65, %v284
  %v371 = vadd.f32 %v66, %v289
  %v372 = vadd.f32 %v67, %v294
  %v373 = vadd.f32 %v68, %v299
  %v374 = vadd.f32 %v69, %v304
  %v375 = vadd.f32 %v70, %v309
  %v376 = vadd.f32 %v71, %v314
  %v377 = vadd.f32 %v72, %v319
  %v378 = vadd.f32 %v73, %v324
  %v379 = vadd.f32 %v74, %v329
  %v380 = vadd.f32 %v75, %v334
  %v381 = vadd.f32 %v76, %v339
  %v382 = vadd.f32 %v77, %v344
  %v383 = vadd.f32 %v78, %v349
  %384 = vst [vmem:[%s2] sm:$0xff] %v352
  %385 = vst [vmem:[%s2 + $0x8] sm:$0xff] %v353
  %386 = vst [vmem:[%s2 + $0x10] sm:$0xff] %v354
  %387 = vst [vmem:[%s2 + $0x18] sm:$0xff] %v355
  %388 = vst [vmem:[%s2 + $0x20] sm:$0xff] %v356
  %389 = vst [vmem:[%s2 + $0x28] sm:$0xff] %v357
  %390 = vst [vmem:[%s2 + $0x30] sm:$0xff] %v358
  %391 = vst [vmem:[%s2 + $0x38] sm:$0xff] %v359
  %392 = vst [vmem:[%s2 + $0x40] sm:$0xff] %v360
  %393 = vst [vmem:[%s2 + $0x48] sm:$0xff] %v361
  %394 = vst [vmem:[%s2 + $0x50] sm:$0xff] %v362
  %395 = vst [vmem:[%s2 + $0x58] sm:$0xff] %v363
  %396 = vst [vmem:[%s2 + $0x60] sm:$0xff] %v364
  %397 = vst [vmem:[%s2 + $0x68] sm:$0xff] %v365
  %398 = vst [vmem:[%s2 + $0x70] sm:$0xff] %v366
  %399 = vst [vmem:[%s2 + $0x78] sm:$0xff] %v367
  %400 = vst [vmem:[%s2 + $0x80] sm:$0xff] %v368
  %401 = vst [vmem:[%s2 + $0x88] sm:$0xff] %v369
  %402 = vst [vmem:[%s2 + $0x90] sm:$0xff] %v370
  %403 = vst [vmem:[%s2 + $0x98] sm:$0xff] %v371
  %404 = vst [vmem:[%s2 + $0xa0] sm:$0xff] %v372
  %405 = vst [vmem:[%s2 + $0xa8] sm:$0xff] %v373
  %406 = vst [vmem:[%s2 + $0xb0] sm:$0xff] %v374
  %407 = vst [vmem:[%s2 + $0xb8] sm:$0xff] %v375
  %408 = vst [vmem:[%s2 + $0xc0] sm:$0xff] %v376
  %409 = vst [vmem:[%s2 + $0xc8] sm:$0xff] %v377
  %410 = vst [vmem:[%s2 + $0xd0] sm:$0xff] %v378
  %411 = vst [vmem:[%s2 + $0xd8] sm:$0xff] %v379
  %412 = vst [vmem:[%s2 + $0xe0] sm:$0xff] %v380
  %413 = vst [vmem:[%s2 + $0xe8] sm:$0xff] %v381
  %414 = vst [vmem:[%s2 + $0xf0] sm:$0xff] %v382
  %415 = vst [vmem:[%s2 + $0xf8] sm:$0xff] %v383
  // Predicated region
  $region14: #{hgcn_forward.5} parent=0 // pred_check
    _
  $region15: #{hgcn_forward.5} parent=0 // pred_check_branch
    %417 = sbr.rel (0) target = $region17
  $region16: #{hgcn_forward.5} parent=0 // pred_region
    _
  $region17: #{hgcn_forward.5} parent=0 // pred_fallthru
    _
  // Predicated region
  $region18: #{hgcn_forward.5} parent=0 // pred_check
    _
  $region19: #{hgcn_forward.5} parent=0 // pred_check_branch
    %419 = sbr.rel (0) target = $region21
  $region20: #{hgcn_forward.5} parent=0 // pred_region
    _
  $region21: #{hgcn_forward.5} parent=0 // pred_fallthru
    _

// kernel: hgcn_forward.6
$region0: #{hgcn_forward.6}
  #allocation0 [shape = 'u32[]', space=smem, size = 0x4, offset = 0x4, fixed_abs, tag = 'smem constant byte address 0x4 - core index']
  #allocation1 [shape = 'u32[144,128]{1,0:T(1,128)}', space=vmem, size = 0x12000, scoped, tag = 'internal scratch']
  %s0 = inlined_call_operand.vmem [shape: f32[256,256], index: 0, kind: input, shape index: {}]
  %s1 = inlined_call_operand.vmem [shape: f32[256,128], index: 1, kind: input, shape index: {}]
  %s2 = inlined_call_operand.vmem [shape: f32[256,128], index: 2, kind: output, shape index: {}]
  %s3 = sld [smem:[#allocation0]]
  $region22: #{hgcn_forward.6} parent=0
    _
  %s5 = ssub.s32 1, %s3
  %s6 = scalar_select 0, %s5, %s3
  // Predicated region
  $region2: #{hgcn_forward.6} parent=0 // pred_check
    _
  $region3: #{hgcn_forward.6} parent=0 // pred_check_branch
    %8 = sbr.rel (0) target = $region5
  $region4: #{hgcn_forward.6} parent=0 // pred_region
    _
  $region5: #{hgcn_forward.6} parent=0 // pred_fallthru
    _
  // Predicated region
  $region6: #{hgcn_forward.6} parent=0 // pred_check
    _
  $region7: #{hgcn_forward.6} parent=0 // pred_check_branch
    %10 = sbr.rel (0) target = $region9
  $region8: #{hgcn_forward.6} parent=0 // pred_region
    _
  $region9: #{hgcn_forward.6} parent=0 // pred_fallthru
    _
  %p11 = scmp.eq.s32.totalorder 0, 0
  // Predicated region
  $region10: #{hgcn_forward.6} parent=0 // pred_check
    %p12 = pneg %p11
  $region11: #{hgcn_forward.6} parent=0 // pred_check_branch
    %14 = sbr.rel (%p12) target = $region13
  $region12: #{hgcn_forward.6} parent=0 // pred_region
    %15 = vst [vmem:[%s2] sm:$0xff] 0.0
    %16 = vst [vmem:[%s2 + $0x8] sm:$0xff] 0.0
    %17 = vst [vmem:[%s2 + $0x10] sm:$0xff] 0.0
    %18 = vst [vmem:[%s2 + $0x18] sm:$0xff] 0.0
    %19 = vst [vmem:[%s2 + $0x20] sm:$0xff] 0.0
    %20 = vst [vmem:[%s2 + $0x28] sm:$0xff] 0.0
    %21 = vst [vmem:[%s2 + $0x30] sm:$0xff] 0.0
    %22 = vst [vmem:[%s2 + $0x38] sm:$0xff] 0.0
    %23 = vst [vmem:[%s2 + $0x40] sm:$0xff] 0.0
    %24 = vst [vmem:[%s2 + $0x48] sm:$0xff] 0.0
    %25 = vst [vmem:[%s2 + $0x50] sm:$0xff] 0.0
    %26 = vst [vmem:[%s2 + $0x58] sm:$0xff] 0.0
    %27 = vst [vmem:[%s2 + $0x60] sm:$0xff] 0.0
    %28 = vst [vmem:[%s2 + $0x68] sm:$0xff] 0.0
    %29 = vst [vmem:[%s2 + $0x70] sm:$0xff] 0.0
    %30 = vst [vmem:[%s2 + $0x78] sm:$0xff] 0.0
    %31 = vst [vmem:[%s2 + $0x80] sm:$0xff] 0.0
    %32 = vst [vmem:[%s2 + $0x88] sm:$0xff] 0.0
    %33 = vst [vmem:[%s2 + $0x90] sm:$0xff] 0.0
    %34 = vst [vmem:[%s2 + $0x98] sm:$0xff] 0.0
    %35 = vst [vmem:[%s2 + $0xa0] sm:$0xff] 0.0
    %36 = vst [vmem:[%s2 + $0xa8] sm:$0xff] 0.0
    %37 = vst [vmem:[%s2 + $0xb0] sm:$0xff] 0.0
    %38 = vst [vmem:[%s2 + $0xb8] sm:$0xff] 0.0
    %39 = vst [vmem:[%s2 + $0xc0] sm:$0xff] 0.0
    %40 = vst [vmem:[%s2 + $0xc8] sm:$0xff] 0.0
    %41 = vst [vmem:[%s2 + $0xd0] sm:$0xff] 0.0
    %42 = vst [vmem:[%s2 + $0xd8] sm:$0xff] 0.0
    %43 = vst [vmem:[%s2 + $0xe0] sm:$0xff] 0.0
    %44 = vst [vmem:[%s2 + $0xe8] sm:$0xff] 0.0
    %45 = vst [vmem:[%s2 + $0xf0] sm:$0xff] 0.0
    %46 = vst [vmem:[%s2 + $0xf8] sm:$0xff] 0.0
  $region13: #{hgcn_forward.6} parent=0 // pred_fallthru
    _
  %v47 = vld [vmem:[%s2] sm:$0xff]
  %v48 = vld [vmem:[%s2 + $0x8] sm:$0xff]
  %v49 = vld [vmem:[%s2 + $0x10] sm:$0xff]
  %v50 = vld [vmem:[%s2 + $0x18] sm:$0xff]
  %v51 = vld [vmem:[%s2 + $0x20] sm:$0xff]
  %v52 = vld [vmem:[%s2 + $0x28] sm:$0xff]
  %v53 = vld [vmem:[%s2 + $0x30] sm:$0xff]
  %v54 = vld [vmem:[%s2 + $0x38] sm:$0xff]
  %v55 = vld [vmem:[%s2 + $0x40] sm:$0xff]
  %v56 = vld [vmem:[%s2 + $0x48] sm:$0xff]
  %v57 = vld [vmem:[%s2 + $0x50] sm:$0xff]
  %v58 = vld [vmem:[%s2 + $0x58] sm:$0xff]
  %v59 = vld [vmem:[%s2 + $0x60] sm:$0xff]
  %v60 = vld [vmem:[%s2 + $0x68] sm:$0xff]
  %v61 = vld [vmem:[%s2 + $0x70] sm:$0xff]
  %v62 = vld [vmem:[%s2 + $0x78] sm:$0xff]
  %v63 = vld [vmem:[%s2 + $0x80] sm:$0xff]
  %v64 = vld [vmem:[%s2 + $0x88] sm:$0xff]
  %v65 = vld [vmem:[%s2 + $0x90] sm:$0xff]
  %v66 = vld [vmem:[%s2 + $0x98] sm:$0xff]
  %v67 = vld [vmem:[%s2 + $0xa0] sm:$0xff]
  %v68 = vld [vmem:[%s2 + $0xa8] sm:$0xff]
  %v69 = vld [vmem:[%s2 + $0xb0] sm:$0xff]
  %v70 = vld [vmem:[%s2 + $0xb8] sm:$0xff]
  %v71 = vld [vmem:[%s2 + $0xc0] sm:$0xff]
  %v72 = vld [vmem:[%s2 + $0xc8] sm:$0xff]
  %v73 = vld [vmem:[%s2 + $0xd0] sm:$0xff]
  %v74 = vld [vmem:[%s2 + $0xd8] sm:$0xff]
  %v75 = vld [vmem:[%s2 + $0xe0] sm:$0xff]
  %v76 = vld [vmem:[%s2 + $0xe8] sm:$0xff]
  %v77 = vld [vmem:[%s2 + $0xf0] sm:$0xff]
  %v78 = vld [vmem:[%s2 + $0xf8] sm:$0xff]
  %v79 = vld [vmem:[%s0] sm:$0xff]
  %v80 = vld [vmem:[%s0 + $0x8] sm:$0xff]
  %v81 = vld [vmem:[%s0 + $0x10] sm:$0xff]
  %v82 = vld [vmem:[%s0 + $0x18] sm:$0xff]
  %v83 = vld [vmem:[%s0 + $0x20] sm:$0xff]
  %v84 = vld [vmem:[%s0 + $0x28] sm:$0xff]
  %v85 = vld [vmem:[%s0 + $0x30] sm:$0xff]
  %v86 = vld [vmem:[%s0 + $0x38] sm:$0xff]
  %v87 = vld [vmem:[%s0 + $0x40] sm:$0xff]
  %v88 = vld [vmem:[%s0 + $0x48] sm:$0xff]
  %v89 = vld [vmem:[%s0 + $0x50] sm:$0xff]
  %v90 = vld [vmem:[%s0 + $0x58] sm:$0xff]
  %v91 = vld [vmem:[%s0 + $0x60] sm:$0xff]
  %v92 = vld [vmem:[%s0 + $0x68] sm:$0xff]
  %v93 = vld [vmem:[%s0 + $0x70] sm:$0xff]
  %v94 = vld [vmem:[%s0 + $0x78] sm:$0xff]
  %v95 = vld [vmem:[%s0 + $0x80] sm:$0xff]
  %v96 = vld [vmem:[%s0 + $0x88] sm:$0xff]
  %v97 = vld [vmem:[%s0 + $0x90] sm:$0xff]
  %v98 = vld [vmem:[%s0 + $0x98] sm:$0xff]
  %v99 = vld [vmem:[%s0 + $0xa0] sm:$0xff]
  %v100 = vld [vmem:[%s0 + $0xa8] sm:$0xff]
  %v101 = vld [vmem:[%s0 + $0xb0] sm:$0xff]
  %v102 = vld [vmem:[%s0 + $0xb8] sm:$0xff]
  %v103 = vld [vmem:[%s0 + $0xc0] sm:$0xff]
  %v104 = vld [vmem:[%s0 + $0xc8] sm:$0xff]
  %v105 = vld [vmem:[%s0 + $0xd0] sm:$0xff]
  %v106 = vld [vmem:[%s0 + $0xd8] sm:$0xff]
  %v107 = vld [vmem:[%s0 + $0xe0] sm:$0xff]
  %v108 = vld [vmem:[%s0 + $0xe8] sm:$0xff]
  %v109 = vld [vmem:[%s0 + $0xf0] sm:$0xff]
  %v110 = vld [vmem:[%s0 + $0xf8] sm:$0xff]
  %v111 = vld [vmem:[%s0 + $0x100] sm:$0xff]
  %v112 = vld [vmem:[%s0 + $0x108] sm:$0xff]
  %v113 = vld [vmem:[%s0 + $0x110] sm:$0xff]
  %v114 = vld [vmem:[%s0 + $0x118] sm:$0xff]
  %v115 = vld [vmem:[%s0 + $0x120] sm:$0xff]
  %v116 = vld [vmem:[%s0 + $0x128] sm:$0xff]
  %v117 = vld [vmem:[%s0 + $0x130] sm:$0xff]
  %v118 = vld [vmem:[%s0 + $0x138] sm:$0xff]
  %v119 = vld [vmem:[%s0 + $0x140] sm:$0xff]
  %v120 = vld [vmem:[%s0 + $0x148] sm:$0xff]
  %v121 = vld [vmem:[%s0 + $0x150] sm:$0xff]
  %v122 = vld [vmem:[%s0 + $0x158] sm:$0xff]
  %v123 = vld [vmem:[%s0 + $0x160] sm:$0xff]
  %v124 = vld [vmem:[%s0 + $0x168] sm:$0xff]
  %v125 = vld [vmem:[%s0 + $0x170] sm:$0xff]
  %v126 = vld [vmem:[%s0 + $0x178] sm:$0xff]
  %v127 = vld [vmem:[%s0 + $0x180] sm:$0xff]
  %v128 = vld [vmem:[%s0 + $0x188] sm:$0xff]
  %v129 = vld [vmem:[%s0 + $0x190] sm:$0xff]
  %v130 = vld [vmem:[%s0 + $0x198] sm:$0xff]
  %v131 = vld [vmem:[%s0 + $0x1a0] sm:$0xff]
  %v132 = vld [vmem:[%s0 + $0x1a8] sm:$0xff]
  %v133 = vld [vmem:[%s0 + $0x1b0] sm:$0xff]
  %v134 = vld [vmem:[%s0 + $0x1b8] sm:$0xff]
  %v135 = vld [vmem:[%s0 + $0x1c0] sm:$0xff]
  %v136 = vld [vmem:[%s0 + $0x1c8] sm:$0xff]
  %v137 = vld [vmem:[%s0 + $0x1d0] sm:$0xff]
  %v138 = vld [vmem:[%s0 + $0x1d8] sm:$0xff]
  %v139 = vld [vmem:[%s0 + $0x1e0] sm:$0xff]
  %v140 = vld [vmem:[%s0 + $0x1e8] sm:$0xff]
  %v141 = vld [vmem:[%s0 + $0x1f0] sm:$0xff]
  %v142 = vld [vmem:[%s0 + $0x1f8] sm:$0xff]
  %v143 = vld [vmem:[%s1] sm:$0xff]
  %v144 = vld [vmem:[%s1 + $0x8] sm:$0xff]
  %v145 = vld [vmem:[%s1 + $0x10] sm:$0xff]
  %v146 = vld [vmem:[%s1 + $0x18] sm:$0xff]
  %v147 = vld [vmem:[%s1 + $0x20] sm:$0xff]
  %v148 = vld [vmem:[%s1 + $0x28] sm:$0xff]
  %v149 = vld [vmem:[%s1 + $0x30] sm:$0xff]
  %v150 = vld [vmem:[%s1 + $0x38] sm:$0xff]
  %v151 = vld [vmem:[%s1 + $0x40] sm:$0xff]
  %v152 = vld [vmem:[%s1 + $0x48] sm:$0xff]
  %v153 = vld [vmem:[%s1 + $0x50] sm:$0xff]
  %v154 = vld [vmem:[%s1 + $0x58] sm:$0xff]
  %v155 = vld [vmem:[%s1 + $0x60] sm:$0xff]
  %v156 = vld [vmem:[%s1 + $0x68] sm:$0xff]
  %v157 = vld [vmem:[%s1 + $0x70] sm:$0xff]
  %v158 = vld [vmem:[%s1 + $0x78] sm:$0xff]
  %v159 = vld [vmem:[%s1 + $0x80] sm:$0xff]
  %v160 = vld [vmem:[%s1 + $0x88] sm:$0xff]
  %v161 = vld [vmem:[%s1 + $0x90] sm:$0xff]
  %v162 = vld [vmem:[%s1 + $0x98] sm:$0xff]
  %v163 = vld [vmem:[%s1 + $0xa0] sm:$0xff]
  %v164 = vld [vmem:[%s1 + $0xa8] sm:$0xff]
  %v165 = vld [vmem:[%s1 + $0xb0] sm:$0xff]
  %v166 = vld [vmem:[%s1 + $0xb8] sm:$0xff]
  %v167 = vld [vmem:[%s1 + $0xc0] sm:$0xff]
  %v168 = vld [vmem:[%s1 + $0xc8] sm:$0xff]
  %v169 = vld [vmem:[%s1 + $0xd0] sm:$0xff]
  %v170 = vld [vmem:[%s1 + $0xd8] sm:$0xff]
  %v171 = vld [vmem:[%s1 + $0xe0] sm:$0xff]
  %v172 = vld [vmem:[%s1 + $0xe8] sm:$0xff]
  %v173 = vld [vmem:[%s1 + $0xf0] sm:$0xff]
  %v174 = vld [vmem:[%s1 + $0xf8] sm:$0xff]
  %175 = vmatprep.subr.mxu0 0.0
  %176 = vmatpush1.msra.mxu0 %v158
  %177 = vmatprep.subr.mxu0 0.0
  %178 = vmatpush1.msra.mxu0 %v157
  %179 = vmatprep.subr.mxu0 0.0
  %180 = vmatpush1.msra.mxu0 %v156
  %181 = vmatprep.subr.mxu0 0.0
  %182 = vmatpush1.msra.mxu0 %v155
  %183 = vmatprep.subr.mxu0 0.0
  %184 = vmatpush1.msra.mxu0 %v154
  %185 = vmatprep.subr.mxu0 0.0
  %186 = vmatpush1.msra.mxu0 %v153
  %187 = vmatprep.subr.mxu0 0.0
  %188 = vmatpush1.msra.mxu0 %v152
  %189 = vmatprep.subr.mxu0 0.0
  %190 = vmatpush1.msra.mxu0 %v151
  %191 = vmatprep.subr.mxu0 0.0
  %192 = vmatpush1.msra.mxu0 %v150
  %193 = vmatprep.subr.mxu0 0.0
  %194 = vmatpush1.msra.mxu0 %v149
  %195 = vmatprep.subr.mxu0 0.0
  %196 = vmatpush1.msra.mxu0 %v148
  %197 = vmatprep.subr.mxu0 0.0
  %198 = vmatpush1.msra.mxu0 %v147
  %199 = vmatprep.subr.mxu0 0.0
  %200 = vmatpush1.msra.mxu0 %v146
  %201 = vmatprep.subr.mxu0 0.0
  %202 = vmatpush1.msra.mxu0 %v145
  %203 = vmatprep.subr.mxu0 0.0
  %204 = vmatpush1.msra.mxu0 %v144
  %205 = vmatprep.subr.mxu0 0.0
  %206 = vmatpush1.msra.mxu0 %v143
  %207 = vmatprep.subr.mxu0 0.0
  %208 = vmatpush2.msra.mxu0 %v174
  %209 = vmatprep.subr.mxu0 0.0
  %210 = vmatpush2.msra.mxu0 %v173
  %211 = vmatprep.subr.mxu0 0.0
  %212 = vmatpush2.msra.mxu0 %v172
  %213 = vmatprep.subr.mxu0 0.0
  %214 = vmatpush2.msra.mxu0 %v171
  %215 = vmatprep.subr.mxu0 0.0
  %216 = vmatpush2.msra.mxu0 %v170
  %217 = vmatprep.subr.mxu0 0.0
  %218 = vmatpush2.msra.mxu0 %v169
  %219 = vmatprep.subr.mxu0 0.0
  %220 = vmatpush2.msra.mxu0 %v168
  %221 = vmatprep.subr.mxu0 0.0
  %222 = vmatpush2.msra.mxu0 %v167
  %223 = vmatprep.subr.mxu0 0.0
  %224 = vmatpush2.msra.mxu0 %v166
  %225 = vmatprep.subr.mxu0 0.0
  %226 = vmatpush2.msra.mxu0 %v165
  %227 = vmatprep.subr.mxu0 0.0
  %228 = vmatpush2.msra.mxu0 %v164
  %229 = vmatprep.subr.mxu0 0.0
  %230 = vmatpush2.msra.mxu0 %v163
  %231 = vmatprep.subr.mxu0 0.0
  %232 = vmatpush2.msra.mxu0 %v162
  %233 = vmatprep.subr.mxu0 0.0
  %234 = vmatpush2.msra.mxu0 %v161
  %235 = vmatprep.subr.mxu0 0.0
  %236 = vmatpush2.msra.mxu0 %v160
  %237 = vmatprep.subr.mxu0 0.0
  %238 = vmatpush2.msra.mxu0 %v159
  %239 = vmatprep.mubr.f32.mxu0 %v80
  %240 = vmatmul.mubr.f32.gmra.mxu0 %v79
  %v241 = vpop.f32.mrf.mxu0
  %v242 = vadd.f32 0.0, %v241
  %v243 = vpop.f32.mrf.mxu0
  %244 = vmatprep.mubr.f32.mxu0 %v82
  %245 = vmatmul.mubr.f32.gmra.mxu0 %v81
  %v246 = vpop.f32.mrf.mxu0
  %v247 = vadd.f32 0.0, %v246
  %v248 = vpop.f32.mrf.mxu0
  %249 = vmatprep.mubr.f32.mxu0 %v84
  %250 = vmatmul.mubr.f32.gmra.mxu0 %v83
  %v251 = vpop.f32.mrf.mxu0
  %v252 = vadd.f32 0.0, %v251
  %v253 = vpop.f32.mrf.mxu0
  %254 = vmatprep.mubr.f32.mxu0 %v86
  %255 = vmatmul.mubr.f32.gmra.mxu0 %v85
  %v256 = vpop.f32.mrf.mxu0
  %v257 = vadd.f32 0.0, %v256
  %v258 = vpop.f32.mrf.mxu0
  %259 = vmatprep.mubr.f32.mxu0 %v88
  %260 = vmatmul.mubr.f32.gmra.mxu0 %v87
  %v261 = vpop.f32.mrf.mxu0
  %v262 = vadd.f32 0.0, %v261
  %v263 = vpop.f32.mrf.mxu0
  %264 = vmatprep.mubr.f32.mxu0 %v90
  %265 = vmatmul.mubr.f32.gmra.mxu0 %v89
  %v266 = vpop.f32.mrf.mxu0
  %v267 = vadd.f32 0.0, %v266
  %v268 = vpop.f32.mrf.mxu0
  %269 = vmatprep.mubr.f32.mxu0 %v92
  %270 = vmatmul.mubr.f32.gmra.mxu0 %v91
  %v271 = vpop.f32.mrf.mxu0
  %v272 = vadd.f32 0.0, %v271
  %v273 = vpop.f32.mrf.mxu0
  %274 = vmatprep.mubr.f32.mxu0 %v94
  %275 = vmatmul.mubr.f32.gmra.mxu0 %v93
  %v276 = vpop.f32.mrf.mxu0
  %v277 = vadd.f32 0.0, %v276
  %v278 = vpop.f32.mrf.mxu0
  %279 = vmatprep.mubr.f32.mxu0 %v96
  %280 = vmatmul.mubr.f32.gmra.mxu0 %v95
  %v281 = vpop.f32.mrf.mxu0
  %v282 = vadd.f32 0.0, %v281
  %v283 = vpop.f32.mrf.mxu0
  %284 = vmatprep.mubr.f32.mxu0 %v98
  %285 = vmatmul.mubr.f32.gmra.mxu0 %v97
  %v286 = vpop.f32.mrf.mxu0
  %v287 = vadd.f32 0.0, %v286
  %v288 = vpop.f32.mrf.mxu0
  %289 = vmatprep.mubr.f32.mxu0 %v100
  %290 = vmatmul.mubr.f32.gmra.mxu0 %v99
  %v291 = vpop.f32.mrf.mxu0
  %v292 = vadd.f32 0.0, %v291
  %v293 = vpop.f32.mrf.mxu0
  %294 = vmatprep.mubr.f32.mxu0 %v102
  %295 = vmatmul.mubr.f32.gmra.mxu0 %v101
  %v296 = vpop.f32.mrf.mxu0
  %v297 = vadd.f32 0.0, %v296
  %v298 = vpop.f32.mrf.mxu0
  %299 = vmatprep.mubr.f32.mxu0 %v104
  %300 = vmatmul.mubr.f32.gmra.mxu0 %v103
  %v301 = vpop.f32.mrf.mxu0
  %v302 = vadd.f32 0.0, %v301
  %v303 = vpop.f32.mrf.mxu0
  %304 = vmatprep.mubr.f32.mxu0 %v106
  %305 = vmatmul.mubr.f32.gmra.mxu0 %v105
  %v306 = vpop.f32.mrf.mxu0
  %v307 = vadd.f32 0.0, %v306
  %v308 = vpop.f32.mrf.mxu0
  %309 = vmatprep.mubr.f32.mxu0 %v108
  %310 = vmatmul.mubr.f32.gmra.mxu0 %v107
  %v311 = vpop.f32.mrf.mxu0
  %v312 = vadd.f32 0.0, %v311
  %v313 = vpop.f32.mrf.mxu0
  %314 = vmatprep.mubr.f32.mxu0 %v110
  %315 = vmatmul.mubr.f32.gmra.mxu0 %v109
  %v316 = vpop.f32.mrf.mxu0
  %v317 = vadd.f32 0.0, %v316
  %v318 = vpop.f32.mrf.mxu0
  %319 = vmatprep.mubr.f32.mxu0 %v112
  %320 = vmatmul.mubr.f32.gmra.mxu0 %v111
  %v321 = vpop.f32.mrf.mxu0
  %v322 = vadd.f32 0.0, %v321
  %v323 = vpop.f32.mrf.mxu0
  %324 = vmatprep.mubr.f32.mxu0 %v114
  %325 = vmatmul.mubr.f32.gmra.mxu0 %v113
  %v326 = vpop.f32.mrf.mxu0
  %v327 = vadd.f32 0.0, %v326
  %v328 = vpop.f32.mrf.mxu0
  %329 = vmatprep.mubr.f32.mxu0 %v116
  %330 = vmatmul.mubr.f32.gmra.mxu0 %v115
  %v331 = vpop.f32.mrf.mxu0
  %v332 = vadd.f32 0.0, %v331
  %v333 = vpop.f32.mrf.mxu0
  %334 = vmatprep.mubr.f32.mxu0 %v118
  %335 = vmatmul.mubr.f32.gmra.mxu0 %v117
  %v336 = vpop.f32.mrf.mxu0
  %v337 = vadd.f32 0.0, %v336
  %v338 = vpop.f32.mrf.mxu0
  %339 = vmatprep.mubr.f32.mxu0 %v120
  %340 = vmatmul.mubr.f32.gmra.mxu0 %v119
  %v341 = vpop.f32.mrf.mxu0
  %v342 = vadd.f32 0.0, %v341
  %v343 = vpop.f32.mrf.mxu0
  %344 = vmatprep.mubr.f32.mxu0 %v122
  %345 = vmatmul.mubr.f32.gmra.mxu0 %v121
  %v346 = vpop.f32.mrf.mxu0
  %v347 = vadd.f32 0.0, %v346
  %v348 = vpop.f32.mrf.mxu0
  %349 = vmatprep.mubr.f32.mxu0 %v124
  %350 = vmatmul.mubr.f32.gmra.mxu0 %v123
  %v351 = vpop.f32.mrf.mxu0
  %v352 = vadd.f32 0.0, %v351
  %v353 = vpop.f32.mrf.mxu0
  %354 = vmatprep.mubr.f32.mxu0 %v126
  %355 = vmatmul.mubr.f32.gmra.mxu0 %v125
  %v356 = vpop.f32.mrf.mxu0
  %v357 = vadd.f32 0.0, %v356
  %v358 = vpop.f32.mrf.mxu0
  %359 = vmatprep.mubr.f32.mxu0 %v128
  %360 = vmatmul.mubr.f32.gmra.mxu0 %v127
  %v361 = vpop.f32.mrf.mxu0
  %v362 = vadd.f32 0.0, %v361
  %v363 = vpop.f32.mrf.mxu0
  %364 = vmatprep.mubr.f32.mxu0 %v130
  %365 = vmatmul.mubr.f32.gmra.mxu0 %v129
  %v366 = vpop.f32.mrf.mxu0
  %v367 = vadd.f32 0.0, %v366
  %v368 = vpop.f32.mrf.mxu0
  %369 = vmatprep.mubr.f32.mxu0 %v132
  %370 = vmatmul.mubr.f32.gmra.mxu0 %v131
  %v371 = vpop.f32.mrf.mxu0
  %v372 = vadd.f32 0.0, %v371
  %v373 = vpop.f32.mrf.mxu0
  %374 = vmatprep.mubr.f32.mxu0 %v134
  %375 = vmatmul.mubr.f32.gmra.mxu0 %v133
  %v376 = vpop.f32.mrf.mxu0
  %v377 = vadd.f32 0.0, %v376
  %v378 = vpop.f32.mrf.mxu0
  %379 = vmatprep.mubr.f32.mxu0 %v136
  %380 = vmatmul.mubr.f32.gmra.mxu0 %v135
  %v381 = vpop.f32.mrf.mxu0
  %v382 = vadd.f32 0.0, %v381
  %v383 = vpop.f32.mrf.mxu0
  %384 = vmatprep.mubr.f32.mxu0 %v138
  %385 = vmatmul.mubr.f32.gmra.mxu0 %v137
  %v386 = vpop.f32.mrf.mxu0
  %v387 = vadd.f32 0.0, %v386
  %v388 = vpop.f32.mrf.mxu0
  %389 = vmatprep.mubr.f32.mxu0 %v140
  %390 = vmatmul.mubr.f32.gmra.mxu0 %v139
  %v391 = vpop.f32.mrf.mxu0
  %v392 = vadd.f32 0.0, %v391
  %v393 = vpop.f32.mrf.mxu0
  %394 = vmatprep.mubr.f32.mxu0 %v142
  %395 = vmatmul.mubr.f32.gmra.mxu0 %v141
  %v396 = vpop.f32.mrf.mxu0
  %v397 = vadd.f32 0.0, %v396
  %v398 = vpop.f32.mrf.mxu0
  %399 = vdwg.mxu0
  %v400 = vadd.f32 %v47, %v242
  %v401 = vadd.f32 %v48, %v247
  %v402 = vadd.f32 %v49, %v252
  %v403 = vadd.f32 %v50, %v257
  %v404 = vadd.f32 %v51, %v262
  %v405 = vadd.f32 %v52, %v267
  %v406 = vadd.f32 %v53, %v272
  %v407 = vadd.f32 %v54, %v277
  %v408 = vadd.f32 %v55, %v282
  %v409 = vadd.f32 %v56, %v287
  %v410 = vadd.f32 %v57, %v292
  %v411 = vadd.f32 %v58, %v297
  %v412 = vadd.f32 %v59, %v302
  %v413 = vadd.f32 %v60, %v307
  %v414 = vadd.f32 %v61, %v312
  %v415 = vadd.f32 %v62, %v317
  %v416 = vadd.f32 %v63, %v322
  %v417 = vadd.f32 %v64, %v327
  %v418 = vadd.f32 %v65, %v332
  %v419 = vadd.f32 %v66, %v337
  %v420 = vadd.f32 %v67, %v342
  %v421 = vadd.f32 %v68, %v347
  %v422 = vadd.f32 %v69, %v352
  %v423 = vadd.f32 %v70, %v357
  %v424 = vadd.f32 %v71, %v362
  %v425 = vadd.f32 %v72, %v367
  %v426 = vadd.f32 %v73, %v372
  %v427 = vadd.f32 %v74, %v377
  %v428 = vadd.f32 %v75, %v382
  %v429 = vadd.f32 %v76, %v387
  %v430 = vadd.f32 %v77, %v392
  %v431 = vadd.f32 %v78, %v397
  %432 = vst [vmem:[%s2] sm:$0xff] %v400
  %433 = vst [vmem:[%s2 + $0x8] sm:$0xff] %v401
  %434 = vst [vmem:[%s2 + $0x10] sm:$0xff] %v402
  %435 = vst [vmem:[%s2 + $0x18] sm:$0xff] %v403
  %436 = vst [vmem:[%s2 + $0x20] sm:$0xff] %v404
  %437 = vst [vmem:[%s2 + $0x28] sm:$0xff] %v405
  %438 = vst [vmem:[%s2 + $0x30] sm:$0xff] %v406
  %439 = vst [vmem:[%s2 + $0x38] sm:$0xff] %v407
  %440 = vst [vmem:[%s2 + $0x40] sm:$0xff] %v408
  %441 = vst [vmem:[%s2 + $0x48] sm:$0xff] %v409
  %442 = vst [vmem:[%s2 + $0x50] sm:$0xff] %v410
  %443 = vst [vmem:[%s2 + $0x58] sm:$0xff] %v411
  %444 = vst [vmem:[%s2 + $0x60] sm:$0xff] %v412
  %445 = vst [vmem:[%s2 + $0x68] sm:$0xff] %v413
  %446 = vst [vmem:[%s2 + $0x70] sm:$0xff] %v414
  %447 = vst [vmem:[%s2 + $0x78] sm:$0xff] %v415
  %448 = vst [vmem:[%s2 + $0x80] sm:$0xff] %v416
  %449 = vst [vmem:[%s2 + $0x88] sm:$0xff] %v417
  %450 = vst [vmem:[%s2 + $0x90] sm:$0xff] %v418
  %451 = vst [vmem:[%s2 + $0x98] sm:$0xff] %v419
  %452 = vst [vmem:[%s2 + $0xa0] sm:$0xff] %v420
  %453 = vst [vmem:[%s2 + $0xa8] sm:$0xff] %v421
  %454 = vst [vmem:[%s2 + $0xb0] sm:$0xff] %v422
  %455 = vst [vmem:[%s2 + $0xb8] sm:$0xff] %v423
  %456 = vst [vmem:[%s2 + $0xc0] sm:$0xff] %v424
  %457 = vst [vmem:[%s2 + $0xc8] sm:$0xff] %v425
  %458 = vst [vmem:[%s2 + $0xd0] sm:$0xff] %v426
  %459 = vst [vmem:[%s2 + $0xd8] sm:$0xff] %v427
  %460 = vst [vmem:[%s2 + $0xe0] sm:$0xff] %v428
  %461 = vst [vmem:[%s2 + $0xe8] sm:$0xff] %v429
  %462 = vst [vmem:[%s2 + $0xf0] sm:$0xff] %v430
  %463 = vst [vmem:[%s2 + $0xf8] sm:$0xff] %v431
  // Predicated region
  $region14: #{hgcn_forward.6} parent=0 // pred_check
    _
  $region15: #{hgcn_forward.6} parent=0 // pred_check_branch
    %465 = sbr.rel (0) target = $region17
  $region16: #{hgcn_forward.6} parent=0 // pred_region
    _
  $region17: #{hgcn_forward.6} parent=0 // pred_fallthru
    _
  // Predicated region
  $region18: #{hgcn_forward.6} parent=0 // pred_check
    _
  $region19: #{hgcn_forward.6} parent=0 // pred_check_branch
    %467 = sbr.rel (0) target = $region21
  $region20: #{hgcn_forward.6} parent=0 // pred_region
    _
  $region21: #{hgcn_forward.6} parent=0 // pred_fallthru
    _

// kernel: hgcn_forward.7
$region0: #{hgcn_forward.7}
  #allocation0 [shape = 'u32[]', space=smem, size = 0x4, offset = 0x4, fixed_abs, tag = 'smem constant byte address 0x4 - core index']
  #allocation1 [shape = 'u32[144,128]{1,0:T(1,128)}', space=vmem, size = 0x12000, scoped, tag = 'internal scratch']
  %s0 = inlined_call_operand.vmem [shape: f32[104,256], index: 0, kind: input, shape index: {}]
  %s1 = inlined_call_operand.vmem [shape: f32[256,128], index: 1, kind: input, shape index: {}]
  %s2 = inlined_call_operand.vmem [shape: f32[1,128], index: 2, kind: input, shape index: {}]
  %s3 = inlined_call_operand.vmem [shape: f32[104,128], index: 3, kind: output, shape index: {}]
  %s4 = sld [smem:[#allocation0]]
  $region30: #{hgcn_forward.7} parent=0
    _
  %s6 = ssub.s32 1, %s4
  %s7 = scalar_select 0, %s6, %s4
  // Predicated region
  $region2: #{hgcn_forward.7} parent=0 // pred_check
    _
  $region3: #{hgcn_forward.7} parent=0 // pred_check_branch
    %9 = sbr.rel (0) target = $region5
  $region4: #{hgcn_forward.7} parent=0 // pred_region
    _
  $region5: #{hgcn_forward.7} parent=0 // pred_fallthru
    _
  // Predicated region
  $region6: #{hgcn_forward.7} parent=0 // pred_check
    _
  $region7: #{hgcn_forward.7} parent=0 // pred_check_branch
    %11 = sbr.rel (0) target = $region9
  $region8: #{hgcn_forward.7} parent=0 // pred_region
    _
  $region9: #{hgcn_forward.7} parent=0 // pred_fallthru
    _
  // Predicated region
  $region10: #{hgcn_forward.7} parent=0 // pred_check
    _
  $region11: #{hgcn_forward.7} parent=0 // pred_check_branch
    %13 = sbr.rel (0) target = $region13
  $region12: #{hgcn_forward.7} parent=0 // pred_region
    _
  $region13: #{hgcn_forward.7} parent=0 // pred_fallthru
    _
  %p14 = scmp.eq.s32.totalorder 0, 0
  // Predicated region
  $region14: #{hgcn_forward.7} parent=0 // pred_check
    %p15 = pneg %p14
  $region15: #{hgcn_forward.7} parent=0 // pred_check_branch
    %17 = sbr.rel (%p15) target = $region17
  $region16: #{hgcn_forward.7} parent=0 // pred_region
    %18 = vst [vmem:[%s3] sm:$0xff] 0.0
    %19 = vst [vmem:[%s3 + $0x8] sm:$0xff] 0.0
    %20 = vst [vmem:[%s3 + $0x10] sm:$0xff] 0.0
    %21 = vst [vmem:[%s3 + $0x18] sm:$0xff] 0.0
    %22 = vst [vmem:[%s3 + $0x20] sm:$0xff] 0.0
    %23 = vst [vmem:[%s3 + $0x28] sm:$0xff] 0.0
    %24 = vst [vmem:[%s3 + $0x30] sm:$0xff] 0.0
    %25 = vst [vmem:[%s3 + $0x38] sm:$0xff] 0.0
    %26 = vst [vmem:[%s3 + $0x40] sm:$0xff] 0.0
    %27 = vst [vmem:[%s3 + $0x48] sm:$0xff] 0.0
    %28 = vst [vmem:[%s3 + $0x50] sm:$0xff] 0.0
    %29 = vst [vmem:[%s3 + $0x58] sm:$0xff] 0.0
    %30 = vst [vmem:[%s3 + $0x60] sm:$0xff] 0.0
  $region17: #{hgcn_forward.7} parent=0 // pred_fallthru
    _
  %v31 = vld [vmem:[%s3] sm:$0xff]
  %v32 = vld [vmem:[%s3 + $0x8] sm:$0xff]
  %v33 = vld [vmem:[%s3 + $0x10] sm:$0xff]
  %v34 = vld [vmem:[%s3 + $0x18] sm:$0xff]
  %v35 = vld [vmem:[%s3 + $0x20] sm:$0xff]
  %v36 = vld [vmem:[%s3 + $0x28] sm:$0xff]
  %v37 = vld [vmem:[%s3 + $0x30] sm:$0xff]
  %v38 = vld [vmem:[%s3 + $0x38] sm:$0xff]
  %v39 = vld [vmem:[%s3 + $0x40] sm:$0xff]
  %v40 = vld [vmem:[%s3 + $0x48] sm:$0xff]
  %v41 = vld [vmem:[%s3 + $0x50] sm:$0xff]
  %v42 = vld [vmem:[%s3 + $0x58] sm:$0xff]
  %v43 = vld [vmem:[%s3 + $0x60] sm:$0xff]
  %v44 = vld [vmem:[%s0] sm:$0xff]
  %v45 = vld [vmem:[%s0 + $0x8] sm:$0xff]
  %v46 = vld [vmem:[%s0 + $0x10] sm:$0xff]
  %v47 = vld [vmem:[%s0 + $0x18] sm:$0xff]
  %v48 = vld [vmem:[%s0 + $0x20] sm:$0xff]
  %v49 = vld [vmem:[%s0 + $0x28] sm:$0xff]
  %v50 = vld [vmem:[%s0 + $0x30] sm:$0xff]
  %v51 = vld [vmem:[%s0 + $0x38] sm:$0xff]
  %v52 = vld [vmem:[%s0 + $0x40] sm:$0xff]
  %v53 = vld [vmem:[%s0 + $0x48] sm:$0xff]
  %v54 = vld [vmem:[%s0 + $0x50] sm:$0xff]
  %v55 = vld [vmem:[%s0 + $0x58] sm:$0xff]
  %v56 = vld [vmem:[%s0 + $0x60] sm:$0xff]
  %v57 = vld [vmem:[%s0 + $0x68] sm:$0xff]
  %v58 = vld [vmem:[%s0 + $0x70] sm:$0xff]
  %v59 = vld [vmem:[%s0 + $0x78] sm:$0xff]
  %v60 = vld [vmem:[%s0 + $0x80] sm:$0xff]
  %v61 = vld [vmem:[%s0 + $0x88] sm:$0xff]
  %v62 = vld [vmem:[%s0 + $0x90] sm:$0xff]
  %v63 = vld [vmem:[%s0 + $0x98] sm:$0xff]
  %v64 = vld [vmem:[%s0 + $0xa0] sm:$0xff]
  %v65 = vld [vmem:[%s0 + $0xa8] sm:$0xff]
  %v66 = vld [vmem:[%s0 + $0xb0] sm:$0xff]
  %v67 = vld [vmem:[%s0 + $0xb8] sm:$0xff]
  %v68 = vld [vmem:[%s0 + $0xc0] sm:$0xff]
  %v69 = vld [vmem:[%s0 + $0xc8] sm:$0xff]
  %v70 = vld [vmem:[%s1] sm:$0xff]
  %v71 = vld [vmem:[%s1 + $0x8] sm:$0xff]
  %v72 = vld [vmem:[%s1 + $0x10] sm:$0xff]
  %v73 = vld [vmem:[%s1 + $0x18] sm:$0xff]
  %v74 = vld [vmem:[%s1 + $0x20] sm:$0xff]
  %v75 = vld [vmem:[%s1 + $0x28] sm:$0xff]
  %v76 = vld [vmem:[%s1 + $0x30] sm:$0xff]
  %v77 = vld [vmem:[%s1 + $0x38] sm:$0xff]
  %v78 = vld [vmem:[%s1 + $0x40] sm:$0xff]
  %v79 = vld [vmem:[%s1 + $0x48] sm:$0xff]
  %v80 = vld [vmem:[%s1 + $0x50] sm:$0xff]
  %v81 = vld [vmem:[%s1 + $0x58] sm:$0xff]
  %v82 = vld [vmem:[%s1 + $0x60] sm:$0xff]
  %v83 = vld [vmem:[%s1 + $0x68] sm:$0xff]
  %v84 = vld [vmem:[%s1 + $0x70] sm:$0xff]
  %v85 = vld [vmem:[%s1 + $0x78] sm:$0xff]
  %v86 = vld [vmem:[%s1 + $0x80] sm:$0xff]
  %v87 = vld [vmem:[%s1 + $0x88] sm:$0xff]
  %v88 = vld [vmem:[%s1 + $0x90] sm:$0xff]
  %v89 = vld [vmem:[%s1 + $0x98] sm:$0xff]
  %v90 = vld [vmem:[%s1 + $0xa0] sm:$0xff]
  %v91 = vld [vmem:[%s1 + $0xa8] sm:$0xff]
  %v92 = vld [vmem:[%s1 + $0xb0] sm:$0xff]
  %v93 = vld [vmem:[%s1 + $0xb8] sm:$0xff]
  %v94 = vld [vmem:[%s1 + $0xc0] sm:$0xff]
  %v95 = vld [vmem:[%s1 + $0xc8] sm:$0xff]
  %v96 = vld [vmem:[%s1 + $0xd0] sm:$0xff]
  %v97 = vld [vmem:[%s1 + $0xd8] sm:$0xff]
  %v98 = vld [vmem:[%s1 + $0xe0] sm:$0xff]
  %v99 = vld [vmem:[%s1 + $0xe8] sm:$0xff]
  %v100 = vld [vmem:[%s1 + $0xf0] sm:$0xff]
  %v101 = vld [vmem:[%s1 + $0xf8] sm:$0xff]
  %102 = vmatprep.subr.mxu0 0.0
  %103 = vmatpush1.msra.mxu0 %v85
  %104 = vmatprep.subr.mxu0 0.0
  %105 = vmatpush1.msra.mxu0 %v84
  %106 = vmatprep.subr.mxu0 0.0
  %107 = vmatpush1.msra.mxu0 %v83
  %108 = vmatprep.subr.mxu0 0.0
  %109 = vmatpush1.msra.mxu0 %v82
  %110 = vmatprep.subr.mxu0 0.0
  %111 = vmatpush1.msra.mxu0 %v81
  %112 = vmatprep.subr.mxu0 0.0
  %113 = vmatpush1.msra.mxu0 %v80
  %114 = vmatprep.subr.mxu0 0.0
  %115 = vmatpush1.msra.mxu0 %v79
  %116 = vmatprep.subr.mxu0 0.0
  %117 = vmatpush1.msra.mxu0 %v78
  %118 = vmatprep.subr.mxu0 0.0
  %119 = vmatpush1.msra.mxu0 %v77
  %120 = vmatprep.subr.mxu0 0.0
  %121 = vmatpush1.msra.mxu0 %v76
  %122 = vmatprep.subr.mxu0 0.0
  %123 = vmatpush1.msra.mxu0 %v75
  %124 = vmatprep.subr.mxu0 0.0
  %125 = vmatpush1.msra.mxu0 %v74
  %126 = vmatprep.subr.mxu0 0.0
  %127 = vmatpush1.msra.mxu0 %v73
  %128 = vmatprep.subr.mxu0 0.0
  %129 = vmatpush1.msra.mxu0 %v72
  %130 = vmatprep.subr.mxu0 0.0
  %131 = vmatpush1.msra.mxu0 %v71
  %132 = vmatprep.subr.mxu0 0.0
  %133 = vmatpush1.msra.mxu0 %v70
  %134 = vmatprep.subr.mxu0 0.0
  %135 = vmatpush2.msra.mxu0 %v101
  %136 = vmatprep.subr.mxu0 0.0
  %137 = vmatpush2.msra.mxu0 %v100
  %138 = vmatprep.subr.mxu0 0.0
  %139 = vmatpush2.msra.mxu0 %v99
  %140 = vmatprep.subr.mxu0 0.0
  %141 = vmatpush2.msra.mxu0 %v98
  %142 = vmatprep.subr.mxu0 0.0
  %143 = vmatpush2.msra.mxu0 %v97
  %144 = vmatprep.subr.mxu0 0.0
  %145 = vmatpush2.msra.mxu0 %v96
  %146 = vmatprep.subr.mxu0 0.0
  %147 = vmatpush2.msra.mxu0 %v95
  %148 = vmatprep.subr.mxu0 0.0
  %149 = vmatpush2.msra.mxu0 %v94
  %150 = vmatprep.subr.mxu0 0.0
  %151 = vmatpush2.msra.mxu0 %v93
  %152 = vmatprep.subr.mxu0 0.0
  %153 = vmatpush2.msra.mxu0 %v92
  %154 = vmatprep.subr.mxu0 0.0
  %155 = vmatpush2.msra.mxu0 %v91
  %156 = vmatprep.subr.mxu0 0.0
  %157 = vmatpush2.msra.mxu0 %v90
  %158 = vmatprep.subr.mxu0 0.0
  %159 = vmatpush2.msra.mxu0 %v89
  %160 = vmatprep.subr.mxu0 0.0
  %161 = vmatpush2.msra.mxu0 %v88
  %162 = vmatprep.subr.mxu0 0.0
  %163 = vmatpush2.msra.mxu0 %v87
  %164 = vmatprep.subr.mxu0 0.0
  %165 = vmatpush2.msra.mxu0 %v86
  %166 = vmatprep.mubr.f32.mxu0 %v45
  %167 = vmatmul.mubr.f32.gmra.mxu0 %v44
  %v168 = vpop.f32.mrf.mxu0
  %v169 = vadd.f32 0.0, %v168
  %v170 = vpop.f32.mrf.mxu0
  %171 = vmatprep.mubr.f32.mxu0 %v47
  %172 = vmatmul.mubr.f32.gmra.mxu0 %v46
  %v173 = vpop.f32.mrf.mxu0
  %v174 = vadd.f32 0.0, %v173
  %v175 = vpop.f32.mrf.mxu0
  %176 = vmatprep.mubr.f32.mxu0 %v49
  %177 = vmatmul.mubr.f32.gmra.mxu0 %v48
  %v178 = vpop.f32.mrf.mxu0
  %v179 = vadd.f32 0.0, %v178
  %v180 = vpop.f32.mrf.mxu0
  %181 = vmatprep.mubr.f32.mxu0 %v51
  %182 = vmatmul.mubr.f32.gmra.mxu0 %v50
  %v183 = vpop.f32.mrf.mxu0
  %v184 = vadd.f32 0.0, %v183
  %v185 = vpop.f32.mrf.mxu0
  %186 = vmatprep.mubr.f32.mxu0 %v53
  %187 = vmatmul.mubr.f32.gmra.mxu0 %v52
  %v188 = vpop.f32.mrf.mxu0
  %v189 = vadd.f32 0.0, %v188
  %v190 = vpop.f32.mrf.mxu0
  %191 = vmatprep.mubr.f32.mxu0 %v55
  %192 = vmatmul.mubr.f32.gmra.mxu0 %v54
  %v193 = vpop.f32.mrf.mxu0
  %v194 = vadd.f32 0.0, %v193
  %v195 = vpop.f32.mrf.mxu0
  %196 = vmatprep.mubr.f32.mxu0 %v57
  %197 = vmatmul.mubr.f32.gmra.mxu0 %v56
  %v198 = vpop.f32.mrf.mxu0
  %v199 = vadd.f32 0.0, %v198
  %v200 = vpop.f32.mrf.mxu0
  %201 = vmatprep.mubr.f32.mxu0 %v59
  %202 = vmatmul.mubr.f32.gmra.mxu0 %v58
  %v203 = vpop.f32.mrf.mxu0
  %v204 = vadd.f32 0.0, %v203
  %v205 = vpop.f32.mrf.mxu0
  %206 = vmatprep.mubr.f32.mxu0 %v61
  %207 = vmatmul.mubr.f32.gmra.mxu0 %v60
  %v208 = vpop.f32.mrf.mxu0
  %v209 = vadd.f32 0.0, %v208
  %v210 = vpop.f32.mrf.mxu0
  %211 = vmatprep.mubr.f32.mxu0 %v63
  %212 = vmatmul.mubr.f32.gmra.mxu0 %v62
  %v213 = vpop.f32.mrf.mxu0
  %v214 = vadd.f32 0.0, %v213
  %v215 = vpop.f32.mrf.mxu0
  %216 = vmatprep.mubr.f32.mxu0 %v65
  %217 = vmatmul.mubr.f32.gmra.mxu0 %v64
  %v218 = vpop.f32.mrf.mxu0
  %v219 = vadd.f32 0.0, %v218
  %v220 = vpop.f32.mrf.mxu0
  %221 = vmatprep.mubr.f32.mxu0 %v67
  %222 = vmatmul.mubr.f32.gmra.mxu0 %v66
  %v223 = vpop.f32.mrf.mxu0
  %v224 = vadd.f32 0.0, %v223
  %v225 = vpop.f32.mrf.mxu0
  %226 = vmatprep.mubr.f32.mxu0 %v69
  %227 = vmatmul.mubr.f32.gmra.mxu0 %v68
  %v228 = vpop.f32.mrf.mxu0
  %v229 = vadd.f32 0.0, %v228
  %v230 = vpop.f32.mrf.mxu0
  %231 = vdwg.mxu0
  %v232 = vadd.f32 %v31, %v169
  %v233 = vadd.f32 %v32, %v174
  %v234 = vadd.f32 %v33, %v179
  %v235 = vadd.f32 %v34, %v184
  %v236 = vadd.f32 %v35, %v189
  %v237 = vadd.f32 %v36, %v194
  %v238 = vadd.f32 %v37, %v199
  %v239 = vadd.f32 %v38, %v204
  %v240 = vadd.f32 %v39, %v209
  %v241 = vadd.f32 %v40, %v214
  %v242 = vadd.f32 %v41, %v219
  %v243 = vadd.f32 %v42, %v224
  %v244 = vadd.f32 %v43, %v229
  %245 = vst [vmem:[%s3] sm:$0xff] %v232
  %246 = vst [vmem:[%s3 + $0x8] sm:$0xff] %v233
  %247 = vst [vmem:[%s3 + $0x10] sm:$0xff] %v234
  %248 = vst [vmem:[%s3 + $0x18] sm:$0xff] %v235
  %249 = vst [vmem:[%s3 + $0x20] sm:$0xff] %v236
  %250 = vst [vmem:[%s3 + $0x28] sm:$0xff] %v237
  %251 = vst [vmem:[%s3 + $0x30] sm:$0xff] %v238
  %252 = vst [vmem:[%s3 + $0x38] sm:$0xff] %v239
  %253 = vst [vmem:[%s3 + $0x40] sm:$0xff] %v240
  %254 = vst [vmem:[%s3 + $0x48] sm:$0xff] %v241
  %255 = vst [vmem:[%s3 + $0x50] sm:$0xff] %v242
  %256 = vst [vmem:[%s3 + $0x58] sm:$0xff] %v243
  %257 = vst [vmem:[%s3 + $0x60] sm:$0xff] %v244
  // Predicated region
  $region18: #{hgcn_forward.7} parent=0 // pred_check
    %p258 = pneg %p14
  $region19: #{hgcn_forward.7} parent=0 // pred_check_branch
    %260 = sbr.rel (%p258) target = $region21
  $region20: #{hgcn_forward.7} parent=0 // pred_region
    %v261 = vld [vmem:[%s3] sm:$0xff]
    %v262 = vld [vmem:[%s3 + $0x8] sm:$0xff]
    %v263 = vld [vmem:[%s3 + $0x10] sm:$0xff]
    %v264 = vld [vmem:[%s3 + $0x18] sm:$0xff]
    %v265 = vld [vmem:[%s3 + $0x20] sm:$0xff]
    %v266 = vld [vmem:[%s3 + $0x28] sm:$0xff]
    %v267 = vld [vmem:[%s3 + $0x30] sm:$0xff]
    %v268 = vld [vmem:[%s3 + $0x38] sm:$0xff]
    %v269 = vld [vmem:[%s3 + $0x40] sm:$0xff]
    %v270 = vld [vmem:[%s3 + $0x48] sm:$0xff]
    %v271 = vld [vmem:[%s3 + $0x50] sm:$0xff]
    %v272 = vld [vmem:[%s3 + $0x58] sm:$0xff]
    %v273 = vld [vmem:[%s3 + $0x60] sm:$0xff]
    %v274 = vld [vmem:[%s2] sm:$0x1]
    %v276 = vlaneseq
    %v277 = vshrl.u32 %v276, 7
    %v278 = vsub.s32 0, %v277
    %v279 = vrot.slane %v274, %v278
    %v281 = vadd.f32 %v261, %v279
    %v282 = vadd.f32 %v262, %v279
    %v283 = vadd.f32 %v263, %v279
    %v284 = vadd.f32 %v264, %v279
    %v285 = vadd.f32 %v265, %v279
    %v286 = vadd.f32 %v266, %v279
    %v287 = vadd.f32 %v267, %v279
    %v288 = vadd.f32 %v268, %v279
    %v289 = vadd.f32 %v269, %v279
    %v290 = vadd.f32 %v270, %v279
    %v291 = vadd.f32 %v271, %v279
    %v292 = vadd.f32 %v272, %v279
    %v293 = vadd.f32 %v273, %v279
    %294 = vst [vmem:[%s3] sm:$0xff] %v281
    %295 = vst [vmem:[%s3 + $0x8] sm:$0xff] %v282
    %296 = vst [vmem:[%s3 + $0x10] sm:$0xff] %v283
    %297 = vst [vmem:[%s3 + $0x18] sm:$0xff] %v284
    %298 = vst [vmem:[%s3 + $0x20] sm:$0xff] %v285
    %299 = vst [vmem:[%s3 + $0x28] sm:$0xff] %v286
    %300 = vst [vmem:[%s3 + $0x30] sm:$0xff] %v287
    %301 = vst [vmem:[%s3 + $0x38] sm:$0xff] %v288
    %302 = vst [vmem:[%s3 + $0x40] sm:$0xff] %v289
    %303 = vst [vmem:[%s3 + $0x48] sm:$0xff] %v290
    %304 = vst [vmem:[%s3 + $0x50] sm:$0xff] %v291
    %305 = vst [vmem:[%s3 + $0x58] sm:$0xff] %v292
    %306 = vst [vmem:[%s3 + $0x60] sm:$0xff] %v293
  $region21: #{hgcn_forward.7} parent=0 // pred_fallthru
    _
  // Predicated region
  $region22: #{hgcn_forward.7} parent=0 // pred_check
    _
  $region23: #{hgcn_forward.7} parent=0 // pred_check_branch
    %308 = sbr.rel (0) target = $region25
  $region24: #{hgcn_forward.7} parent=0 // pred_region
    _
  $region25: #{hgcn_forward.7} parent=0 // pred_fallthru
    _
  // Predicated region
  $region26: #{hgcn_forward.7} parent=0 // pred_check
    _
  $region27: #{hgcn_forward.7} parent=0 // pred_check_branch
    %310 = sbr.rel (0) target = $region29
  $region28: #{hgcn_forward.7} parent=0 // pred_region
    _
  $region29: #{hgcn_forward.7} parent=0 // pred_fallthru
    _

</llo_original>
